<compile_context>
chip_gen: v5e
topology: v5e:2x2
jax: 0.10.0
libtpu: 0.0.40
codegen_flags: <defaults>
</compile_context>

<pallas_src>
import functools
import math

import jax
import jax.numpy as jnp
from jax import lax
from jax.experimental import pallas as pl
from jax.experimental.pallas import tpu as pltpu


def _layernorm(v, g, b, eps=1e-5):
    mu = jnp.mean(v, axis=-1, keepdims=True)
    var = jnp.mean((v - mu) ** 2, axis=-1, keepdims=True)
    return (v - mu) * lax.rsqrt(var + eps) * g + b


def _transformer_block_kernel(n_heads, tq,
                              x_q_ref, x_kv_ref,
                              wq_ref, wk_ref, wv_ref,
                              bq_ref, bk_ref, bv_ref,
                              wo_ref, bo_ref,
                              g1_ref, b1_ref,
                              w1_ref, bf1_ref, w2_ref, bf2_ref,
                              g2_ref, b2_ref,
                              o_ref, acc_ref):
    h = pl.program_id(2)
    qi = pl.program_id(1)

    @pl.when(h == 0)
    def _init():
        acc_ref[...] = jnp.zeros_like(acc_ref)

    xq = x_q_ref[0]                      # (TQ, E) f32 — query tile (also residual stream)
    xkv = x_kv_ref[0]                    # (S, E)  f32 — full sequence for K/V
    S = xkv.shape[0]
    E = xq.shape[1]
    D = E // n_heads
    scale = 1.0 / math.sqrt(D)

    xq_b = xq.astype(jnp.bfloat16)
    xkv_b = xkv.astype(jnp.bfloat16)

    # Per-head projections: bf16 MXU matmuls with f32 accumulation.
    q = jnp.dot(xq_b, wq_ref[0], preferred_element_type=jnp.float32) + bq_ref[0]    # (TQ, D)
    k = jnp.dot(xkv_b, wk_ref[0], preferred_element_type=jnp.float32) + bk_ref[0]   # (S, D)
    v = jnp.dot(xkv_b, wv_ref[0], preferred_element_type=jnp.float32) + bv_ref[0]   # (S, D)

    # Scores: contract on the trailing head dim of both operands (no explicit .T).
    s = lax.dot_general(q.astype(jnp.bfloat16), k.astype(jnp.bfloat16),
                        (((1,), (1,)), ((), ())),
                        preferred_element_type=jnp.float32) * scale                 # (TQ, S)

    # Causal mask with absolute query offsets; large finite negative (tile/NaN safe).
    row = qi * tq + lax.broadcasted_iota(jnp.int32, (tq, S), 0)
    col = lax.broadcasted_iota(jnp.int32, (tq, S), 1)
    s = jnp.where(col > row, -1e30, s)

    # Softmax in f32; denominator via approx reciprocal on the EUP.
    s = s - jnp.max(s, axis=-1, keepdims=True)
    p = jnp.exp(s)
    p = p * pl.reciprocal(jnp.sum(p, axis=-1, keepdims=True), approx=True)

    oh = jnp.dot(p.astype(jnp.bfloat16), v.astype(jnp.bfloat16),
                 preferred_element_type=jnp.float32)                                # (TQ, D)

    # This head's contribution to the output projection, accumulated across heads.
    acc_ref[...] += jnp.dot(oh.astype(jnp.bfloat16), wo_ref[0],
                            preferred_element_type=jnp.float32)                     # (TQ, E)

    @pl.when(h == n_heads - 1)
    def _finalize():
        attn = acc_ref[...] + bo_ref[...]
        x1 = _layernorm(xq + attn, g1_ref[...], b1_ref[...])
        h1 = jnp.dot(x1.astype(jnp.bfloat16), w1_ref[...],
                     preferred_element_type=jnp.float32) + bf1_ref[...]
        h1 = jnp.maximum(h1, 0.0)
        ff = jnp.dot(h1.astype(jnp.bfloat16), w2_ref[...],
                     preferred_element_type=jnp.float32) + bf2_ref[...]
        o_ref[0] = _layernorm(x1 + ff, g2_ref[...], b2_ref[...]).astype(o_ref.dtype)


def transformer_block(x, params, n_heads, tq=None):
    B, S, E = x.shape
    D = E // n_heads
    assert E % n_heads == 0
    if tq is None:
        tq = S if S <= 128 else 128
    assert S % tq == 0, "sequence length must be divisible by the query tile"
    nq = S // tq

    bf16 = jnp.bfloat16
    wqkv_t = params["w_qkv_t"]            # (E, 3E), columns ordered [Q | K | V]
    bqkv = params["b_qkv"][0]             # (3E,)

    def per_head_w(w):                    # (E, E) -> (H, E, D)
        return w.reshape(E, n_heads, D).transpose(1, 0, 2).astype(bf16)

    wq_h = per_head_w(wqkv_t[:, 0 * E:1 * E])
    wk_h = per_head_w(wqkv_t[:, 1 * E:2 * E])
    wv_h = per_head_w(wqkv_t[:, 2 * E:3 * E])
    bq_h = bqkv[0 * E:1 * E].reshape(n_heads, 1, D)
    bk_h = bqkv[1 * E:2 * E].reshape(n_heads, 1, D)
    bv_h = bqkv[2 * E:3 * E].reshape(n_heads, 1, D)
    wo_h = params["w_o_t"].reshape(n_heads, D, E).astype(bf16)   # rows h*D+d -> (H, D, E)
    bo = params["b_o"]
    g1, b1 = params["ln1_g"], params["ln1_b"]
    w1, bf1 = params["w_ff1_t"].astype(bf16), params["b_ff1"]
    w2, bf2 = params["w_ff2_t"].astype(bf16), params["b_ff2"]
    g2, b2 = params["ln2_g"], params["ln2_b"]

    def full_spec(a):
        nd = a.ndim
        return pl.BlockSpec(a.shape, lambda b, qi, h: (0,) * nd)

    def head_spec(a):
        return pl.BlockSpec((1,) + a.shape[1:], lambda b, qi, h: (h, 0, 0))

    in_specs = [
        pl.BlockSpec((1, tq, E), lambda b, qi, h: (b, qi, 0)),   # x (query tile)
        pl.BlockSpec((1, S, E), lambda b, qi, h: (b, 0, 0)),     # x (full sequence for K/V)
        head_spec(wq_h), head_spec(wk_h), head_spec(wv_h),
        head_spec(bq_h), head_spec(bk_h), head_spec(bv_h),
        head_spec(wo_h), full_spec(bo),
        full_spec(g1), full_spec(b1),
        full_spec(w1), full_spec(bf1), full_spec(w2), full_spec(bf2),
        full_spec(g2), full_spec(b2),
    ]
    out_specs = pl.BlockSpec((1, tq, E), lambda b, qi, h: (b, qi, 0))

    weight_list = [wq_h, wk_h, wv_h, bq_h, bk_h, bv_h, wo_h, bo,
                   g1, b1, w1, bf1, w2, bf2, g2, b2]
    itemsize = jnp.dtype(x.dtype).itemsize
    flops = int(2 * B * S * E * E                 # Q projection
                + 2 * B * nq * S * 2 * E * E      # K,V projections (per query tile)
                + 4 * B * S * S * E               # scores + p@v
                + 2 * B * S * E * E               # output projection
                + 2 * B * S * 8 * E * E)          # FFN
    transcendentals = int(B * n_heads * S * S + 4 * B * S)
    bytes_accessed = int(x.size * itemsize * (1 + nq)
                         + sum(int(a.size) * jnp.dtype(a.dtype).itemsize for a in weight_list)
                         + B * S * E * itemsize)

    kernel = functools.partial(_transformer_block_kernel, n_heads, tq)
    return pl.pallas_call(
        kernel,
        out_shape=jax.ShapeDtypeStruct((B, S, E), x.dtype),
        grid_spec=pltpu.PrefetchScalarGridSpec(
            num_scalar_prefetch=0,
            grid=(B, nq, n_heads),
            in_specs=in_specs,
            out_specs=out_specs,
            scratch_shapes=[pltpu.VMEM((tq, E), jnp.float32)],
        ),
        compiler_params=pltpu.CompilerParams(
            dimension_semantics=("parallel", "parallel", "arbitrary"),
            vmem_limit_bytes=48 * 1024 * 1024,
        ),
        cost_estimate=pl.CostEstimate(
            flops=flops,
            transcendentals=transcendentals,
            bytes_accessed=bytes_accessed,
        ),
    )(x, x, wq_h, wk_h, wv_h, bq_h, bk_h, bv_h, wo_h, bo,
      g1, b1, w1, bf1, w2, bf2, g2, b2)


def init_params(key, n_embed):
    E = n_embed
    ks = jax.random.split(key, 8)
    w_qkv = jax.random.normal(ks[0], (3 * E, E), jnp.float32) * 0.05   # in_proj_weight
    b_qkv = jax.random.normal(ks[1], (3 * E,), jnp.float32) * 0.02     # in_proj_bias
    w_o = jax.random.normal(ks[2], (E, E), jnp.float32) * 0.05         # out_proj.weight
    b_o = jax.random.normal(ks[3], (E,), jnp.float32) * 0.02           # out_proj.bias
    w_ff1 = jax.random.normal(ks[4], (4 * E, E), jnp.float32) * 0.05   # ff[0].weight
    b_ff1 = jax.random.normal(ks[5], (4 * E,), jnp.float32) * 0.02     # ff[0].bias
    w_ff2 = jax.random.normal(ks[6], (E, 4 * E), jnp.float32) * 0.05   # ff[2].weight
    b_ff2 = jax.random.normal(ks[7], (E,), jnp.float32) * 0.02         # ff[2].bias
    return dict(
        w_qkv_t=w_qkv.T, b_qkv=b_qkv.reshape(1, -1),
        w_o_t=w_o.T, b_o=b_o.reshape(1, -1),
        ln1_g=jnp.ones((1, E), jnp.float32), ln1_b=jnp.zeros((1, E), jnp.float32),
        w_ff1_t=w_ff1.T, b_ff1=b_ff1.reshape(1, -1),
        w_ff2_t=w_ff2.T, b_ff2=b_ff2.reshape(1, -1),
        ln2_g=jnp.ones((1, E), jnp.float32), ln2_b=jnp.zeros((1, E), jnp.float32),
    )


def ref_forward(x, params, n_heads):
    """Pure-JAX f32 reference mirroring torch.nn.MultiheadAttention semantics."""
    B, S, E = x.shape
    D = E // n_heads
    qkv = x @ params["w_qkv_t"] + params["b_qkv"][0]
    q, k, v = jnp.split(qkv, 3, axis=-1)

    def split_heads(t):
        return t.reshape(B, S, n_heads, D).transpose(0, 2, 1, 3)

    q, k, v = map(split_heads, (q, k, v))
    s = jnp.einsum("bhqd,bhkd->bhqk", q, k) / math.sqrt(D)
    mask = jnp.triu(jnp.ones((S, S), bool), k=1)
    s = jnp.where(mask, -jnp.inf, s)
    p = jax.nn.softmax(s, axis=-1)
    o = jnp.einsum("bhqk,bhkd->bhqd", p, v).transpose(0, 2, 1, 3).reshape(B, S, E)
    attn = o @ params["w_o_t"] + params["b_o"][0]

    def ln(t, g, b):
        mu = t.mean(-1, keepdims=True)
        var = ((t - mu) ** 2).mean(-1, keepdims=True)
        return (t - mu) / jnp.sqrt(var + 1e-5) * g + b

    x1 = ln(x + attn, params["ln1_g"][0], params["ln1_b"][0])
    h1 = jax.nn.relu(x1 @ params["w_ff1_t"] + params["b_ff1"][0])
    ff = h1 @ params["w_ff2_t"] + params["b_ff2"][0]
    return ln(x1 + ff, params["ln2_g"][0], params["ln2_b"][0])


if __name__ == "__main__":
    B, S, E, H = 2, 8, 32, 4   # batch=2, seq=8, n_embed=32, n_heads=4
    key = jax.random.PRNGKey(0)
    kx, kp = jax.random.split(key)
    x = jax.random.normal(kx, (B, S, E), jnp.float32)
    params = init_params(kp, E)

    out = transformer_block(x, params, H)
    out = jax.block_until_ready(out)

    ref = ref_forward(x, params, H)
    assert out.shape == (B, S, E)
    max_err = float(jnp.max(jnp.abs(out - ref)))
    # bf16 MXU matmuls (f32 accumulation) vs. pure-f32 reference -> relaxed tolerance.
    assert max_err < 3e-2, f"max abs err {max_err}"
    print("KERNEL_OK")
</pallas_src>

<mosaic_0001>
module attributes {stable_mosaic.version = 11 : i64} {
  func.func @_transformer_block_kernel(%arg0: i32, %arg1: i32, %arg2: i32, %arg3: memref<1x8x32xf32, #tpu.memory_space<vmem>>, %arg4: memref<1x8x32xf32, #tpu.memory_space<vmem>>, %arg5: memref<1x32x8xbf16, #tpu.memory_space<vmem>>, %arg6: memref<1x32x8xbf16, #tpu.memory_space<vmem>>, %arg7: memref<1x32x8xbf16, #tpu.memory_space<vmem>>, %arg8: memref<1x1x8xf32, #tpu.memory_space<vmem>>, %arg9: memref<1x1x8xf32, #tpu.memory_space<vmem>>, %arg10: memref<1x1x8xf32, #tpu.memory_space<vmem>>, %arg11: memref<1x8x32xbf16, #tpu.memory_space<vmem>>, %arg12: memref<1x32xf32, #tpu.memory_space<vmem>>, %arg13: memref<1x32xf32, #tpu.memory_space<vmem>>, %arg14: memref<1x32xf32, #tpu.memory_space<vmem>>, %arg15: memref<32x128xbf16, #tpu.memory_space<vmem>>, %arg16: memref<1x128xf32, #tpu.memory_space<vmem>>, %arg17: memref<128x32xbf16, #tpu.memory_space<vmem>>, %arg18: memref<1x32xf32, #tpu.memory_space<vmem>>, %arg19: memref<1x32xf32, #tpu.memory_space<vmem>>, %arg20: memref<1x32xf32, #tpu.memory_space<vmem>>, %arg21: memref<1x8x32xf32, #tpu.memory_space<vmem>>, %arg22: memref<8x32xf32, #tpu.memory_space<vmem>>) attributes {dimension_semantics = [#tpu.dimension_semantics<parallel>, #tpu.dimension_semantics<parallel>, #tpu.dimension_semantics<arbitrary>], iteration_bounds = array<i64: 2, 1, 4>, scalar_prefetch = 0 : i64, scratch_operands = 1 : i64, tpu.core_type = #tpu.core_type<tc>, window_params = [{transform_indices = @transform_0, window_bounds = array<i64: 1, 8, 32>}, {transform_indices = @transform_1, window_bounds = array<i64: 1, 8, 32>}, {transform_indices = @transform_2, window_bounds = array<i64: 1, 32, 8>}, {transform_indices = @transform_3, window_bounds = array<i64: 1, 32, 8>}, {transform_indices = @transform_4, window_bounds = array<i64: 1, 32, 8>}, {transform_indices = @transform_5, window_bounds = array<i64: 1, 1, 8>}, {transform_indices = @transform_6, window_bounds = array<i64: 1, 1, 8>}, {transform_indices = @transform_7, window_bounds = array<i64: 1, 1, 8>}, {transform_indices = @transform_8, window_bounds = array<i64: 1, 8, 32>}, {pipeline_mode = #tpu.pipeline_mode<synchronous>, transform_indices = @transform_9, window_bounds = array<i64: 1, 32>}, {pipeline_mode = #tpu.pipeline_mode<synchronous>, transform_indices = @transform_10, window_bounds = array<i64: 1, 32>}, {pipeline_mode = #tpu.pipeline_mode<synchronous>, transform_indices = @transform_11, window_bounds = array<i64: 1, 32>}, {pipeline_mode = #tpu.pipeline_mode<synchronous>, transform_indices = @transform_12, window_bounds = array<i64: 32, 128>}, {pipeline_mode = #tpu.pipeline_mode<synchronous>, transform_indices = @transform_13, window_bounds = array<i64: 1, 128>}, {pipeline_mode = #tpu.pipeline_mode<synchronous>, transform_indices = @transform_14, window_bounds = array<i64: 128, 32>}, {pipeline_mode = #tpu.pipeline_mode<synchronous>, transform_indices = @transform_15, window_bounds = array<i64: 1, 32>}, {pipeline_mode = #tpu.pipeline_mode<synchronous>, transform_indices = @transform_16, window_bounds = array<i64: 1, 32>}, {pipeline_mode = #tpu.pipeline_mode<synchronous>, transform_indices = @transform_17, window_bounds = array<i64: 1, 32>}, {transform_indices = @transform_18, window_bounds = array<i64: 1, 8, 32>}]} {
    %c0_i32 = arith.constant 0 : i32
    %0 = arith.cmpi eq, %arg2, %c0_i32 : i32
    %1 = arith.extui %0 : i1 to i32
    %c0_i32_0 = arith.constant 0 : i32
    %2 = arith.cmpi ne, %1, %c0_i32_0 : i32
    scf.if %2 {
      %cst_41 = arith.constant 0.000000e+00 : f32
      %66 = vector.broadcast %cst_41 : f32 to vector<8x32xf32>
      %c0_42 = arith.constant 0 : index
      %c0_43 = arith.constant 0 : index
      %67 = vector.load %arg22[%c0_42, %c0_43] : memref<8x32xf32, #tpu.memory_space<vmem>>, vector<8x32xf32>
      tpu.vector_store %arg22[%c0_42, %c0_43], %66 {strides = array<i32>} : memref<8x32xf32, #tpu.memory_space<vmem>>, vector<8x32xf32>,
    } else {
    }
    %c0 = arith.constant 0 : index
    %c0_1 = arith.constant 0 : index
    %c0_2 = arith.constant 0 : index
    %3 = vector.load %arg3[%c0, %c0_1, %c0_2] : memref<1x8x32xf32, #tpu.memory_space<vmem>>, vector<1x8x32xf32>
    %4 = vector.shape_cast %3 : vector<1x8x32xf32> to vector<8x32xf32>
    %c0_3 = arith.constant 0 : index
    %c0_4 = arith.constant 0 : index
    %c0_5 = arith.constant 0 : index
    %5 = vector.load %arg4[%c0_3, %c0_4, %c0_5] : memref<1x8x32xf32, #tpu.memory_space<vmem>>, vector<1x8x32xf32>
    %6 = vector.shape_cast %5 : vector<1x8x32xf32> to vector<8x32xf32>
    %7 = arith.truncf %4 : vector<8x32xf32> to vector<8x32xbf16>
    %8 = arith.truncf %6 : vector<8x32xf32> to vector<8x32xbf16>
    %c0_6 = arith.constant 0 : index
    %c0_7 = arith.constant 0 : index
    %c0_8 = arith.constant 0 : index
    %9 = vector.load %arg5[%c0_6, %c0_7, %c0_8] : memref<1x32x8xbf16, #tpu.memory_space<vmem>>, vector<1x32x8xbf16>
    %10 = vector.shape_cast %9 : vector<1x32x8xbf16> to vector<32x8xbf16>
    %cst = arith.constant dense<0.000000e+00> : vector<8x8xf32>
    %11 = tpu.matmul %7, %10, %cst {dimension_numbers = #tpu.dot_dimension_numbers<[1], [0], [0], [1], [0, 0, 1, 1], [], []>} : vector<8x32xbf16>, vector<32x8xbf16>, vector<8x8xf32> -> vector<8x8xf32>
    %c0_9 = arith.constant 0 : index
    %c0_10 = arith.constant 0 : index
    %c0_11 = arith.constant 0 : index
    %12 = vector.load %arg8[%c0_9, %c0_10, %c0_11] : memref<1x1x8xf32, #tpu.memory_space<vmem>>, vector<1x1x8xf32>
    %13 = vector.shape_cast %12 : vector<1x1x8xf32> to vector<1x8xf32>
    %14 = vector.broadcast %13 : vector<1x8xf32> to vector<8x8xf32>
    %15 = arith.addf %11, %14 : vector<8x8xf32>
    %c0_12 = arith.constant 0 : index
    %c0_13 = arith.constant 0 : index
    %c0_14 = arith.constant 0 : index
    %16 = vector.load %arg6[%c0_12, %c0_13, %c0_14] : memref<1x32x8xbf16, #tpu.memory_space<vmem>>, vector<1x32x8xbf16>
    %17 = vector.shape_cast %16 : vector<1x32x8xbf16> to vector<32x8xbf16>
    %cst_15 = arith.constant dense<0.000000e+00> : vector<8x8xf32>
    %18 = tpu.matmul %8, %17, %cst_15 {dimension_numbers = #tpu.dot_dimension_numbers<[1], [0], [0], [1], [0, 0, 1, 1], [], []>} : vector<8x32xbf16>, vector<32x8xbf16>, vector<8x8xf32> -> vector<8x8xf32>
    %c0_16 = arith.constant 0 : index
    %c0_17 = arith.constant 0 : index
    %c0_18 = arith.constant 0 : index
    %19 = vector.load %arg9[%c0_16, %c0_17, %c0_18] : memref<1x1x8xf32, #tpu.memory_space<vmem>>, vector<1x1x8xf32>
    %20 = vector.shape_cast %19 : vector<1x1x8xf32> to vector<1x8xf32>
    %21 = vector.broadcast %20 : vector<1x8xf32> to vector<8x8xf32>
    %22 = arith.addf %18, %21 : vector<8x8xf32>
    %c0_19 = arith.constant 0 : index
    %c0_20 = arith.constant 0 : index
    %c0_21 = arith.constant 0 : index
    %23 = vector.load %arg7[%c0_19, %c0_20, %c0_21] : memref<1x32x8xbf16, #tpu.memory_space<vmem>>, vector<1x32x8xbf16>
    %24 = vector.shape_cast %23 : vector<1x32x8xbf16> to vector<32x8xbf16>
    %cst_22 = arith.constant dense<0.000000e+00> : vector<8x8xf32>
    %25 = tpu.matmul %8, %24, %cst_22 {dimension_numbers = #tpu.dot_dimension_numbers<[1], [0], [0], [1], [0, 0, 1, 1], [], []>} : vector<8x32xbf16>, vector<32x8xbf16>, vector<8x8xf32> -> vector<8x8xf32>
    %c0_23 = arith.constant 0 : index
    %c0_24 = arith.constant 0 : index
    %c0_25 = arith.constant 0 : index
    %26 = vector.load %arg10[%c0_23, %c0_24, %c0_25] : memref<1x1x8xf32, #tpu.memory_space<vmem>>, vector<1x1x8xf32>
    %27 = vector.shape_cast %26 : vector<1x1x8xf32> to vector<1x8xf32>
    %28 = vector.broadcast %27 : vector<1x8xf32> to vector<8x8xf32>
    %29 = arith.addf %25, %28 : vector<8x8xf32>
    %30 = arith.truncf %15 : vector<8x8xf32> to vector<8x8xbf16>
    %31 = arith.truncf %22 : vector<8x8xf32> to vector<8x8xbf16>
    %cst_26 = arith.constant dense<0.000000e+00> : vector<8x8xf32>
    %32 = tpu.matmul %30, %31, %cst_26 {dimension_numbers = #tpu.dot_dimension_numbers<[1], [1], [0], [0], [0, 0, 1, 0], [], []>} : vector<8x8xbf16>, vector<8x8xbf16>, vector<8x8xf32> -> vector<8x8xf32>
    %cst_27 = arith.constant 0.353553385 : f32
    %33 = vector.broadcast %cst_27 : f32 to vector<8x8xf32>
    %34 = arith.mulf %32, %33 : vector<8x8xf32>
    %c8_i32 = arith.constant 8 : i32
    %35 = arith.muli %arg1, %c8_i32 : i32
    %36 = tpu.iota {dimensions = array<i32: 0>} : vector<8x8xi32>
    %37 = vector.broadcast %35 : i32 to vector<8x8xi32>
    %38 = arith.addi %37, %36 : vector<8x8xi32>
    %39 = tpu.iota {dimensions = array<i32: 1>} : vector<8x8xi32>
    %40 = arith.cmpi sgt, %39, %38 : vector<8x8xi32>
    %cst_28 = arith.constant -1.000000e+30 : f32
    %41 = vector.broadcast %cst_28 : f32 to vector<8x8xf32>
    %42 = arith.select %40, %41, %34 : vector<8x8xi1>, vector<8x8xf32>
    %cst_29 = arith.constant dense<0xFF800000> : vector<8xf32>
    %43 = vector.multi_reduction <maximumf>, %42, %cst_29 [1] : vector<8x8xf32> to vector<8xf32>
    %44 = vector.shape_cast %43 : vector<8xf32> to vector<8x1xf32>
    %45 = vector.broadcast %44 : vector<8x1xf32> to vector<8x8xf32>
    %46 = arith.subf %42, %45 : vector<8x8xf32>
    %47 = math.exp %46 : vector<8x8xf32>
    %cst_30 = arith.constant dense<0.000000e+00> : vector<8xf32>
    %48 = vector.multi_reduction <add>, %47, %cst_30 [1] : vector<8x8xf32> to vector<8xf32>
    %49 = vector.shape_cast %48 : vector<8xf32> to vector<8x1xf32>
    %50 = tpu.reciprocal %49 {approx = true} : vector<8x1xf32> -> vector<8x1xf32>
    %51 = vector.broadcast %50 : vector<8x1xf32> to vector<8x8xf32>
    %52 = arith.mulf %47, %51 : vector<8x8xf32>
    %53 = arith.truncf %52 : vector<8x8xf32> to vector<8x8xbf16>
    %54 = arith.truncf %29 : vector<8x8xf32> to vector<8x8xbf16>
    %cst_31 = arith.constant dense<0.000000e+00> : vector<8x8xf32>
    %55 = tpu.matmul %53, %54, %cst_31 {dimension_numbers = #tpu.dot_dimension_numbers<[1], [0], [0], [1], [0, 0, 1, 1], [], []>} : vector<8x8xbf16>, vector<8x8xbf16>, vector<8x8xf32> -> vector<8x8xf32>
    %c0_32 = arith.constant 0 : index
    %c0_33 = arith.constant 0 : index
    %56 = vector.load %arg22[%c0_32, %c0_33] : memref<8x32xf32, #tpu.memory_space<vmem>>, vector<8x32xf32>
    %57 = arith.truncf %55 : vector<8x8xf32> to vector<8x8xbf16>
    %c0_34 = arith.constant 0 : index
    %c0_35 = arith.constant 0 : index
    %c0_36 = arith.constant 0 : index
    %58 = vector.load %arg11[%c0_34, %c0_35, %c0_36] : memref<1x8x32xbf16, #tpu.memory_space<vmem>>, vector<1x8x32xbf16>
    %59 = vector.shape_cast %58 : vector<1x8x32xbf16> to vector<8x32xbf16>
    %cst_37 = arith.constant dense<0.000000e+00> : vector<8x32xf32>
    %60 = tpu.matmul %57, %59, %cst_37 {dimension_numbers = #tpu.dot_dimension_numbers<[1], [0], [0], [1], [0, 0, 1, 1], [], []>} : vector<8x8xbf16>, vector<8x32xbf16>, vector<8x32xf32> -> vector<8x32xf32>
    %61 = arith.addf %56, %60 : vector<8x32xf32>
    %c0_38 = arith.constant 0 : index
    %c0_39 = arith.constant 0 : index
    %62 = vector.load %arg22[%c0_38, %c0_39] : memref<8x32xf32, #tpu.memory_space<vmem>>, vector<8x32xf32>
    tpu.vector_store %arg22[%c0_38, %c0_39], %61 {strides = array<i32>} : memref<8x32xf32, #tpu.memory_space<vmem>>, vector<8x32xf32>,
    %c3_i32 = arith.constant 3 : i32
    %63 = arith.cmpi eq, %arg2, %c3_i32 : i32
    %64 = arith.extui %63 : i1 to i32
    %c0_i32_40 = arith.constant 0 : i32
    %65 = arith.cmpi ne, %64, %c0_i32_40 : i32
    scf.if %65 {
      %c0_41 = arith.constant 0 : index
      %c0_42 = arith.constant 0 : index
      %66 = vector.load %arg22[%c0_41, %c0_42] : memref<8x32xf32, #tpu.memory_space<vmem>>, vector<8x32xf32>
      %c0_43 = arith.constant 0 : index
      %c0_44 = arith.constant 0 : index
      %67 = vector.load %arg12[%c0_43, %c0_44] : memref<1x32xf32, #tpu.memory_space<vmem>>, vector<1x32xf32>
      %68 = vector.broadcast %67 : vector<1x32xf32> to vector<8x32xf32>
      %69 = arith.addf %66, %68 : vector<8x32xf32>
      %70 = arith.addf %4, %69 : vector<8x32xf32>
      %c0_45 = arith.constant 0 : index
      %c0_46 = arith.constant 0 : index
      %71 = vector.load %arg13[%c0_45, %c0_46] : memref<1x32xf32, #tpu.memory_space<vmem>>, vector<1x32xf32>
      %c0_47 = arith.constant 0 : index
      %c0_48 = arith.constant 0 : index
      %72 = vector.load %arg14[%c0_47, %c0_48] : memref<1x32xf32, #tpu.memory_space<vmem>>, vector<1x32xf32>
      %cst_49 = arith.constant dense<0.000000e+00> : vector<8xf32>
      %73 = vector.multi_reduction <add>, %70, %cst_49 [1] : vector<8x32xf32> to vector<8xf32>
      %74 = vector.shape_cast %73 : vector<8xf32> to vector<8x1xf32>
      %cst_50 = arith.constant 3.200000e+01 : f32
      %75 = vector.broadcast %cst_50 : f32 to vector<8x1xf32>
      %76 = arith.divf %74, %75 : vector<8x1xf32>
      %77 = vector.broadcast %76 : vector<8x1xf32> to vector<8x32xf32>
      %78 = arith.subf %70, %77 : vector<8x32xf32>
      %79 = arith.mulf %78, %78 : vector<8x32xf32>
      %cst_51 = arith.constant dense<0.000000e+00> : vector<8xf32>
      %80 = vector.multi_reduction <add>, %79, %cst_51 [1] : vector<8x32xf32> to vector<8xf32>
      %81 = vector.shape_cast %80 : vector<8xf32> to vector<8x1xf32>
      %cst_52 = arith.constant 3.200000e+01 : f32
      %82 = vector.broadcast %cst_52 : f32 to vector<8x1xf32>
      %83 = arith.divf %81, %82 : vector<8x1xf32>
      %84 = vector.broadcast %76 : vector<8x1xf32> to vector<8x32xf32>
      %85 = arith.subf %70, %84 : vector<8x32xf32>
      %cst_53 = arith.constant 9.99999974E-6 : f32
      %86 = vector.broadcast %cst_53 : f32 to vector<8x1xf32>
      %87 = arith.addf %83, %86 : vector<8x1xf32>
      %88 = math.rsqrt %87 : vector<8x1xf32>
      %89 = vector.broadcast %88 : vector<8x1xf32> to vector<8x32xf32>
      %90 = arith.mulf %85, %89 : vector<8x32xf32>
      %91 = vector.broadcast %71 : vector<1x32xf32> to vector<8x32xf32>
      %92 = arith.mulf %90, %91 : vector<8x32xf32>
      %93 = vector.broadcast %72 : vector<1x32xf32> to vector<8x32xf32>
      %94 = arith.addf %92, %93 : vector<8x32xf32>
      %95 = arith.truncf %94 : vector<8x32xf32> to vector<8x32xbf16>
      %c0_54 = arith.constant 0 : index
      %c0_55 = arith.constant 0 : index
      %96 = vector.load %arg15[%c0_54, %c0_55] : memref<32x128xbf16, #tpu.memory_space<vmem>>, vector<32x128xbf16>
      %cst_56 = arith.constant dense<0.000000e+00> : vector<8x128xf32>
      %97 = tpu.matmul %95, %96, %cst_56 {dimension_numbers = #tpu.dot_dimension_numbers<[1], [0], [0], [1], [0, 0, 1, 1], [], []>} : vector<8x32xbf16>, vector<32x128xbf16>, vector<8x128xf32> -> vector<8x128xf32>
      %c0_57 = arith.constant 0 : index
      %c0_58 = arith.constant 0 : index
      %98 = vector.load %arg16[%c0_57, %c0_58] : memref<1x128xf32, #tpu.memory_space<vmem>>, vector<1x128xf32>
      %99 = vector.broadcast %98 : vector<1x128xf32> to vector<8x128xf32>
      %100 = arith.addf %97, %99 : vector<8x128xf32>
      %cst_59 = arith.constant 0.000000e+00 : f32
      %101 = vector.broadcast %cst_59 : f32 to vector<8x128xf32>
      %102 = arith.maximumf %100, %101 : vector<8x128xf32>
      %103 = arith.truncf %102 : vector<8x128xf32> to vector<8x128xbf16>
      %c0_60 = arith.constant 0 : index
      %c0_61 = arith.constant 0 : index
      %104 = vector.load %arg17[%c0_60, %c0_61] : memref<128x32xbf16, #tpu.memory_space<vmem>>, vector<128x32xbf16>
      %cst_62 = arith.constant dense<0.000000e+00> : vector<8x32xf32>
      %105 = tpu.matmul %103, %104, %cst_62 {dimension_numbers = #tpu.dot_dimension_numbers<[1], [0], [0], [1], [0, 0, 1, 1], [], []>} : vector<8x128xbf16>, vector<128x32xbf16>, vector<8x32xf32> -> vector<8x32xf32>
      %c0_63 = arith.constant 0 : index
      %c0_64 = arith.constant 0 : index
      %106 = vector.load %arg18[%c0_63, %c0_64] : memref<1x32xf32, #tpu.memory_space<vmem>>, vector<1x32xf32>
      %107 = vector.broadcast %106 : vector<1x32xf32> to vector<8x32xf32>
      %108 = arith.addf %105, %107 : vector<8x32xf32>
      %109 = arith.addf %94, %108 : vector<8x32xf32>
      %c0_65 = arith.constant 0 : index
      %c0_66 = arith.constant 0 : index
      %110 = vector.load %arg19[%c0_65, %c0_66] : memref<1x32xf32, #tpu.memory_space<vmem>>, vector<1x32xf32>
      %c0_67 = arith.constant 0 : index
      %c0_68 = arith.constant 0 : index
      %111 = vector.load %arg20[%c0_67, %c0_68] : memref<1x32xf32, #tpu.memory_space<vmem>>, vector<1x32xf32>
      %cst_69 = arith.constant dense<0.000000e+00> : vector<8xf32>
      %112 = vector.multi_reduction <add>, %109, %cst_69 [1] : vector<8x32xf32> to vector<8xf32>
      %113 = vector.shape_cast %112 : vector<8xf32> to vector<8x1xf32>
      %cst_70 = arith.constant 3.200000e+01 : f32
      %114 = vector.broadcast %cst_70 : f32 to vector<8x1xf32>
      %115 = arith.divf %113, %114 : vector<8x1xf32>
      %116 = vector.broadcast %115 : vector<8x1xf32> to vector<8x32xf32>
      %117 = arith.subf %109, %116 : vector<8x32xf32>
      %118 = arith.mulf %117, %117 : vector<8x32xf32>
      %cst_71 = arith.constant dense<0.000000e+00> : vector<8xf32>
      %119 = vector.multi_reduction <add>, %118, %cst_71 [1] : vector<8x32xf32> to vector<8xf32>
      %120 = vector.shape_cast %119 : vector<8xf32> to vector<8x1xf32>
      %cst_72 = arith.constant 3.200000e+01 : f32
      %121 = vector.broadcast %cst_72 : f32 to vector<8x1xf32>
      %122 = arith.divf %120, %121 : vector<8x1xf32>
      %123 = vector.broadcast %115 : vector<8x1xf32> to vector<8x32xf32>
      %124 = arith.subf %109, %123 : vector<8x32xf32>
      %cst_73 = arith.constant 9.99999974E-6 : f32
      %125 = vector.broadcast %cst_73 : f32 to vector<8x1xf32>
      %126 = arith.addf %122, %125 : vector<8x1xf32>
      %127 = math.rsqrt %126 : vector<8x1xf32>
      %128 = vector.broadcast %127 : vector<8x1xf32> to vector<8x32xf32>
      %129 = arith.mulf %124, %128 : vector<8x32xf32>
      %130 = vector.broadcast %110 : vector<1x32xf32> to vector<8x32xf32>
      %131 = arith.mulf %129, %130 : vector<8x32xf32>
      %132 = vector.broadcast %111 : vector<1x32xf32> to vector<8x32xf32>
      %133 = arith.addf %131, %132 : vector<8x32xf32>
      %c0_74 = arith.constant 0 : index
      %c0_75 = arith.constant 0 : index
      %c0_76 = arith.constant 0 : index
      %134 = vector.load %arg21[%c0_74, %c0_75, %c0_76] : memref<1x8x32xf32, #tpu.memory_space<vmem>>, vector<1x8x32xf32>
      %135 = vector.shape_cast %134 : vector<1x8x32xf32> to vector<8x32xf32>
      %136 = vector.shape_cast %133 : vector<8x32xf32> to vector<1x8x32xf32>
      tpu.vector_store %arg21[%c0_74, %c0_75, %c0_76], %136 {strides = array<i32>} : memref<1x8x32xf32, #tpu.memory_space<vmem>>, vector<1x8x32xf32>,
    } else {
    }
    return
  }
  func.func @transform_0(%arg0: i32, %arg1: i32, %arg2: i32) -> (i32, i32, i32) {
    %c0_i32 = arith.constant 0 : i32
    %c0_i32_0 = arith.constant 0 : i32
    return %arg0, %arg1, %c0_i32 : i32, i32, i32
  }
  func.func @transform_1(%arg0: i32, %arg1: i32, %arg2: i32) -> (i32, i32, i32) {
    %c0_i32 = arith.constant 0 : i32
    %c0_i32_0 = arith.constant 0 : i32
    %c0_i32_1 = arith.constant 0 : i32
    return %arg0, %c0_i32, %c0_i32_0 : i32, i32, i32
  }
  func.func @transform_2(%arg0: i32, %arg1: i32, %arg2: i32) -> (i32, i32, i32) {
    %c0_i32 = arith.constant 0 : i32
    %c0_i32_0 = arith.constant 0 : i32
    %c0_i32_1 = arith.constant 0 : i32
    return %arg2, %c0_i32, %c0_i32_0 : i32, i32, i32
  }
  func.func @transform_3(%arg0: i32, %arg1: i32, %arg2: i32) -> (i32, i32, i32) {
    %c0_i32 = arith.constant 0 : i32
    %c0_i32_0 = arith.constant 0 : i32
    %c0_i32_1 = arith.constant 0 : i32
    return %arg2, %c0_i32, %c0_i32_0 : i32, i32, i32
  }
  func.func @transform_4(%arg0: i32, %arg1: i32, %arg2: i32) -> (i32, i32, i32) {
    %c0_i32 = arith.constant 0 : i32
    %c0_i32_0 = arith.constant 0 : i32
    %c0_i32_1 = arith.constant 0 : i32
    return %arg2, %c0_i32, %c0_i32_0 : i32, i32, i32
  }
  func.func @transform_5(%arg0: i32, %arg1: i32, %arg2: i32) -> (i32, i32, i32) {
    %c0_i32 = arith.constant 0 : i32
    %c0_i32_0 = arith.constant 0 : i32
    %c0_i32_1 = arith.constant 0 : i32
    return %arg2, %c0_i32, %c0_i32_0 : i32, i32, i32
  }
  func.func @transform_6(%arg0: i32, %arg1: i32, %arg2: i32) -> (i32, i32, i32) {
    %c0_i32 = arith.constant 0 : i32
    %c0_i32_0 = arith.constant 0 : i32
    %c0_i32_1 = arith.constant 0 : i32
    return %arg2, %c0_i32, %c0_i32_0 : i32, i32, i32
  }
  func.func @transform_7(%arg0: i32, %arg1: i32, %arg2: i32) -> (i32, i32, i32) {
    %c0_i32 = arith.constant 0 : i32
    %c0_i32_0 = arith.constant 0 : i32
    %c0_i32_1 = arith.constant 0 : i32
    return %arg2, %c0_i32, %c0_i32_0 : i32, i32, i32
  }
  func.func @transform_8(%arg0: i32, %arg1: i32, %arg2: i32) -> (i32, i32, i32) {
    %c0_i32 = arith.constant 0 : i32
    %c0_i32_0 = arith.constant 0 : i32
    %c0_i32_1 = arith.constant 0 : i32
    return %arg2, %c0_i32, %c0_i32_0 : i32, i32, i32
  }
  func.func @transform_9(%arg0: i32, %arg1: i32, %arg2: i32) -> (i32, i32) {
    %c0_i32 = arith.constant 0 : i32
    %c0_i32_0 = arith.constant 0 : i32
    %c0_i32_1 = arith.constant 0 : i32
    return %c0_i32, %c0_i32_0 : i32, i32
  }
  func.func @transform_10(%arg0: i32, %arg1: i32, %arg2: i32) -> (i32, i32) {
    %c0_i32 = arith.constant 0 : i32
    %c0_i32_0 = arith.constant 0 : i32
    %c0_i32_1 = arith.constant 0 : i32
    return %c0_i32, %c0_i32_0 : i32, i32
  }
  func.func @transform_11(%arg0: i32, %arg1: i32, %arg2: i32) -> (i32, i32) {
    %c0_i32 = arith.constant 0 : i32
    %c0_i32_0 = arith.constant 0 : i32
    %c0_i32_1 = arith.constant 0 : i32
    return %c0_i32, %c0_i32_0 : i32, i32
  }
  func.func @transform_12(%arg0: i32, %arg1: i32, %arg2: i32) -> (i32, i32) {
    %c0_i32 = arith.constant 0 : i32
    %c0_i32_0 = arith.constant 0 : i32
    %c0_i32_1 = arith.constant 0 : i32
    return %c0_i32, %c0_i32_0 : i32, i32
  }
  func.func @transform_13(%arg0: i32, %arg1: i32, %arg2: i32) -> (i32, i32) {
    %c0_i32 = arith.constant 0 : i32
    %c0_i32_0 = arith.constant 0 : i32
    %c0_i32_1 = arith.constant 0 : i32
    return %c0_i32, %c0_i32_0 : i32, i32
  }
  func.func @transform_14(%arg0: i32, %arg1: i32, %arg2: i32) -> (i32, i32) {
    %c0_i32 = arith.constant 0 : i32
    %c0_i32_0 = arith.constant 0 : i32
    %c0_i32_1 = arith.constant 0 : i32
    return %c0_i32, %c0_i32_0 : i32, i32
  }
  func.func @transform_15(%arg0: i32, %arg1: i32, %arg2: i32) -> (i32, i32) {
    %c0_i32 = arith.constant 0 : i32
    %c0_i32_0 = arith.constant 0 : i32
    %c0_i32_1 = arith.constant 0 : i32
    return %c0_i32, %c0_i32_0 : i32, i32
  }
  func.func @transform_16(%arg0: i32, %arg1: i32, %arg2: i32) -> (i32, i32) {
    %c0_i32 = arith.constant 0 : i32
    %c0_i32_0 = arith.constant 0 : i32
    %c0_i32_1 = arith.constant 0 : i32
    return %c0_i32, %c0_i32_0 : i32, i32
  }
  func.func @transform_17(%arg0: i32, %arg1: i32, %arg2: i32) -> (i32, i32) {
    %c0_i32 = arith.constant 0 : i32
    %c0_i32_0 = arith.constant 0 : i32
    %c0_i32_1 = arith.constant 0 : i32
    return %c0_i32, %c0_i32_0 : i32, i32
  }
  func.func @transform_18(%arg0: i32, %arg1: i32, %arg2: i32) -> (i32, i32, i32) {
    %c0_i32 = arith.constant 0 : i32
    %c0_i32_0 = arith.constant 0 : i32
    return %arg0, %arg1, %c0_i32 : i32, i32, i32
  }
}

</mosaic_0001>

<llo_original>
// kernel: tpu_custom_call.1
$region0: #{tpu_custom_call.1}
  #allocation0 [shape = 'u32[]', space=smem, size = 0x4, offset = 0x4, fixed_abs, tag = 'smem constant byte address 0x4 - core index']
  #allocation1 [shape = 'u32[72,128]{1,0:T(1,128)}', space=vmem, size = 0x9000, scoped, tag = 'internal scratch']
  #allocation2 [shape = 'f32[8,32]{1,0:T(8,128)}', space=vmem, size = 0x1000, scoped, tag = 'scratch operand']
  %s0 = inlined_call_operand.vmem [shape: f32[2,8,32], index: 0, kind: input, shape index: {}]
  %s1 = inlined_call_operand.vmem [shape: f32[2,8,32], index: 1, kind: input, shape index: {}]
  %s2 = inlined_call_operand.vmem [shape: bf16[4,32,8], index: 2, kind: input, shape index: {}]
  %s3 = inlined_call_operand.vmem [shape: bf16[4,32,8], index: 3, kind: input, shape index: {}]
  %s4 = inlined_call_operand.vmem [shape: bf16[4,32,8], index: 4, kind: input, shape index: {}]
  %s5 = inlined_call_operand.vmem [shape: f32[4,1,8], index: 5, kind: input, shape index: {}]
  %s6 = inlined_call_operand.vmem [shape: f32[4,1,8], index: 6, kind: input, shape index: {}]
  %s7 = inlined_call_operand.vmem [shape: f32[4,1,8], index: 7, kind: input, shape index: {}]
  %s8 = inlined_call_operand.vmem [shape: bf16[4,8,32], index: 8, kind: input, shape index: {}]
  %s9 = inlined_call_operand.vmem [shape: f32[1,32], index: 9, kind: input, shape index: {}]
  %s10 = inlined_call_operand.vmem [shape: f32[1,32], index: 10, kind: input, shape index: {}]
  %s11 = inlined_call_operand.vmem [shape: f32[1,32], index: 11, kind: input, shape index: {}]
  %s12 = inlined_call_operand.vmem [shape: bf16[32,128], index: 12, kind: input, shape index: {}]
  %s13 = inlined_call_operand.vmem [shape: f32[1,128], index: 13, kind: input, shape index: {}]
  %s14 = inlined_call_operand.vmem [shape: bf16[128,32], index: 14, kind: input, shape index: {}]
  %s15 = inlined_call_operand.vmem [shape: f32[1,32], index: 15, kind: input, shape index: {}]
  %s16 = inlined_call_operand.vmem [shape: f32[1,32], index: 16, kind: input, shape index: {}]
  %s17 = inlined_call_operand.vmem [shape: f32[1,32], index: 17, kind: input, shape index: {}]
  %s18 = inlined_call_operand.hbm [shape: f32[2,8,32], index: 18, kind: output, shape index: {}]
  %s19 = sld [smem:[#allocation0]]
  $region113: #{tpu_custom_call.1} parent=0
    _
  %s21 = ssub.s32 1, %s19
  %s22 = scalar_select 0, %s21, %s19
  $region1: #{tpu_custom_call.1} parent=0
    #allocation3 [shape = 'u8[8192]{0}', space=vmem, size = 0x2000, scoped, tag = 'output window, operand 0']
    #allocation4 [shape = 's32[2]{0}', space=sflag, size = 0x8, scoped, tag = 'scoped memory for tpu_custom_call.1']
    %23 = vsyncpa [#allocation4], 0
    %s24 = scalar_lea.sflag [#allocation4], 1
    %25 = vsyncpa %s24, 0
    loop: start=0, step=1, limit=10
    $region2: #{tpu_custom_call.1} parent=1 // loop_pre_header
      _
    $region3: #{tpu_custom_call.1} parent=1 // loop_header
      %s27 = sphi 0, %s31
      %p28 = scmp.ge.s32.totalorder %s27, 10
      %s34 = sphi 0, %s53
      %s35 = sphi 0, %s49
      %s36 = sphi 0, %s45
      %s37 = sphi 0, %s34
      %s38 = sphi 0, %s35
      %s39 = sphi 0, %s36
      %s40 = sphi 0, %s37
      %s41 = sphi 0, %s38
      %s42 = sphi 0, %s39
      %s58 = sphi 0, %s60
      %s61 = sphi 0, %s58
      %s62 = sphi 0, %s61
      %s78 = sphi 0, %s62
      %s84 = sphi 0, %s86
      %s87 = sphi 0, %s84
      %s88 = sphi 0, %s87
      %s104 = sphi 0, %s88
      %s110 = sphi 0, %s112
      %s113 = sphi 0, %s110
      %s114 = sphi 0, %s113
      %s130 = sphi 0, %s114
      %s136 = sphi 0, %s138
      %s139 = sphi 0, %s136
      %s140 = sphi 0, %s139
      %s156 = sphi 0, %s140
      %s162 = sphi 0, %s164
      %s165 = sphi 0, %s162
      %s166 = sphi 0, %s165
      %s182 = sphi 0, %s166
      %s188 = sphi 0, %s190
      %s191 = sphi 0, %s188
      %s192 = sphi 0, %s191
      %s208 = sphi 0, %s192
      %s214 = sphi 0, %s216
      %s217 = sphi 0, %s214
      %s218 = sphi 0, %s217
      %s234 = sphi 0, %s218
      %s240 = sphi 0, %s242
      %s243 = sphi 0, %s240
      %s244 = sphi 0, %s243
      %s260 = sphi 0, %s244
      %s266 = sphi 0, %s268
      %s269 = sphi 0, %s266
      %s270 = sphi 0, %s269
      %s286 = sphi 0, %s270
      %s290 = sphi 0, %s290
      %s292 = sphi 0, %s290
      %s293 = sphi 0, %s292
      %s307 = sphi 0, %s293
      %s311 = sphi 0, %s311
      %s313 = sphi 0, %s311
      %s314 = sphi 0, %s313
      %s328 = sphi 0, %s314
      %s332 = sphi 0, %s332
      %s334 = sphi 0, %s332
      %s335 = sphi 0, %s334
      %s349 = sphi 0, %s335
      %s353 = sphi 0, %s353
      %s355 = sphi 0, %s353
      %s356 = sphi 0, %s355
      %s370 = sphi 0, %s356
      %s374 = sphi 0, %s374
      %s376 = sphi 0, %s374
      %s377 = sphi 0, %s376
      %s391 = sphi 0, %s377
      %s395 = sphi 0, %s395
      %s397 = sphi 0, %s395
      %s398 = sphi 0, %s397
      %s412 = sphi 0, %s398
      %s416 = sphi 0, %s416
      %s418 = sphi 0, %s416
      %s419 = sphi 0, %s418
      %s433 = sphi 0, %s419
      %s437 = sphi 0, %s437
      %s439 = sphi 0, %s437
      %s440 = sphi 0, %s439
      %s454 = sphi 0, %s440
      %s458 = sphi 0, %s458
      %s460 = sphi 0, %s458
      %s461 = sphi 0, %s460
      %s475 = sphi 0, %s461
      %s483 = sphi 0, %s485
      %s486 = sphi 0, %s483
      %s487 = sphi 0, %s486
      %s503 = sphi 0, %s487
    $region4: #{tpu_custom_call.1} parent=1 // loop_header_branch
      %30 = sbr.rel (%p28) target = $region8
    $region5: #{tpu_custom_call.1} parent=1 // loop_body
      %s32 = ssub.s32 %s27, 1
      %s33 = ssub.s32 %s27, 2
      %s43 = sadd.s32 1, %s36
      %p44 = scmp.ge.s32.totalorder %s43, 4
      %s45 = scalar_select %p44, 0, %s43
      %s46 = sadd.s32 1, %s35
      %s47 = scalar_select %p44, %s46, %s35
      %p48 = scmp.ge.s32.totalorder %s47, 1
      %s49 = scalar_select %p48, 0, %s47
      %s50 = sadd.s32 1, %s34
      %s51 = scalar_select %p48, %s50, %s34
      %p52 = scmp.ge.s32.totalorder %s51, 2
      %s53 = scalar_select %p52, 0, %s51
      %s54 = ssub.s32 %s34, %s53
      %s55 = ssub.s32 %s35, %s49
      %s56 = sor.u32 %s54, %s55
      %p57 = scmp.eq.s32.totalorder %s56, 0
      %s59 = sadd.s32 %s58, 1
      %s60 = scalar_select %p57, %s58, %s59
      %p63 = pneg %p57
      %p64 = scmp.eq.s32.totalorder %s27, 7
      %p65 = por %p63, %p64
      %p66 = scmp.ne.s32.totalorder %s58, %s61
      %p67 = scmp.eq.s32.totalorder %s27, 0
      %p68 = por %p66, %p67
      %p69 = scmp.ne.s32.totalorder %s58, %s61
      %p70 = scmp.eq.s32.totalorder %s32, 7
      %p71 = por %p69, %p70
      %p72 = scmp.ne.s32.totalorder %s61, %s62
      %p73 = scmp.eq.s32.totalorder %s32, 0
      %p74 = por %p72, %p73
      %p75 = scmp.ne.s32.totalorder %s61, %s62
      %p76 = scmp.eq.s32.totalorder %s33, 7
      %p77 = por %p75, %p76
      %p79 = scmp.ne.s32.totalorder %s62, %s78
      %p80 = scmp.eq.s32.totalorder %s33, 0
      %p81 = por %p79, %p80
      %s82 = ssub.s32 %s34, %s53
      %p83 = scmp.eq.s32.totalorder %s82, 0
      %s85 = sadd.s32 %s84, 1
      %s86 = scalar_select %p83, %s84, %s85
      %p89 = pneg %p83
      %p90 = scmp.eq.s32.totalorder %s27, 7
      %p91 = por %p89, %p90
      %p92 = scmp.ne.s32.totalorder %s84, %s87
      %p93 = scmp.eq.s32.totalorder %s27, 0
      %p94 = por %p92, %p93
      %p95 = scmp.ne.s32.totalorder %s84, %s87
      %p96 = scmp.eq.s32.totalorder %s32, 7
      %p97 = por %p95, %p96
      %p98 = scmp.ne.s32.totalorder %s87, %s88
      %p99 = scmp.eq.s32.totalorder %s32, 0
      %p100 = por %p98, %p99
      %p101 = scmp.ne.s32.totalorder %s87, %s88
      %p102 = scmp.eq.s32.totalorder %s33, 7
      %p103 = por %p101, %p102
      %p105 = scmp.ne.s32.totalorder %s88, %s104
      %p106 = scmp.eq.s32.totalorder %s33, 0
      %p107 = por %p105, %p106
      %s108 = ssub.s32 %s36, %s45
      %p109 = scmp.eq.s32.totalorder %s108, 0
      %s111 = sadd.s32 %s110, 1
      %s112 = scalar_select %p109, %s110, %s111
      %p115 = pneg %p109
      %p116 = scmp.eq.s32.totalorder %s27, 7
      %p117 = por %p115, %p116
      %p118 = scmp.ne.s32.totalorder %s110, %s113
      %p119 = scmp.eq.s32.totalorder %s27, 0
      %p120 = por %p118, %p119
      %p121 = scmp.ne.s32.totalorder %s110, %s113
      %p122 = scmp.eq.s32.totalorder %s32, 7
      %p123 = por %p121, %p122
      %p124 = scmp.ne.s32.totalorder %s113, %s114
      %p125 = scmp.eq.s32.totalorder %s32, 0
      %p126 = por %p124, %p125
      %p127 = scmp.ne.s32.totalorder %s113, %s114
      %p128 = scmp.eq.s32.totalorder %s33, 7
      %p129 = por %p127, %p128
      %p131 = scmp.ne.s32.totalorder %s114, %s130
      %p132 = scmp.eq.s32.totalorder %s33, 0
      %p133 = por %p131, %p132
      %s134 = ssub.s32 %s36, %s45
      %p135 = scmp.eq.s32.totalorder %s134, 0
      %s137 = sadd.s32 %s136, 1
      %s138 = scalar_select %p135, %s136, %s137
      %p141 = pneg %p135
      %p142 = scmp.eq.s32.totalorder %s27, 7
      %p143 = por %p141, %p142
      %p144 = scmp.ne.s32.totalorder %s136, %s139
      %p145 = scmp.eq.s32.totalorder %s27, 0
      %p146 = por %p144, %p145
      %p147 = scmp.ne.s32.totalorder %s136, %s139
      %p148 = scmp.eq.s32.totalorder %s32, 7
      %p149 = por %p147, %p148
      %p150 = scmp.ne.s32.totalorder %s139, %s140
      %p151 = scmp.eq.s32.totalorder %s32, 0
      %p152 = por %p150, %p151
      %p153 = scmp.ne.s32.totalorder %s139, %s140
      %p154 = scmp.eq.s32.totalorder %s33, 7
      %p155 = por %p153, %p154
      %p157 = scmp.ne.s32.totalorder %s140, %s156
      %p158 = scmp.eq.s32.totalorder %s33, 0
      %p159 = por %p157, %p158
      %s160 = ssub.s32 %s36, %s45
      %p161 = scmp.eq.s32.totalorder %s160, 0
      %s163 = sadd.s32 %s162, 1
      %s164 = scalar_select %p161, %s162, %s163
      %p167 = pneg %p161
      %p168 = scmp.eq.s32.totalorder %s27, 7
      %p169 = por %p167, %p168
      %p170 = scmp.ne.s32.totalorder %s162, %s165
      %p171 = scmp.eq.s32.totalorder %s27, 0
      %p172 = por %p170, %p171
      %p173 = scmp.ne.s32.totalorder %s162, %s165
      %p174 = scmp.eq.s32.totalorder %s32, 7
      %p175 = por %p173, %p174
      %p176 = scmp.ne.s32.totalorder %s165, %s166
      %p177 = scmp.eq.s32.totalorder %s32, 0
      %p178 = por %p176, %p177
      %p179 = scmp.ne.s32.totalorder %s165, %s166
      %p180 = scmp.eq.s32.totalorder %s33, 7
      %p181 = por %p179, %p180
      %p183 = scmp.ne.s32.totalorder %s166, %s182
      %p184 = scmp.eq.s32.totalorder %s33, 0
      %p185 = por %p183, %p184
      %s186 = ssub.s32 %s36, %s45
      %p187 = scmp.eq.s32.totalorder %s186, 0
      %s189 = sadd.s32 %s188, 1
      %s190 = scalar_select %p187, %s188, %s189
      %p193 = pneg %p187
      %p194 = scmp.eq.s32.totalorder %s27, 7
      %p195 = por %p193, %p194
      %p196 = scmp.ne.s32.totalorder %s188, %s191
      %p197 = scmp.eq.s32.totalorder %s27, 0
      %p198 = por %p196, %p197
      %p199 = scmp.ne.s32.totalorder %s188, %s191
      %p200 = scmp.eq.s32.totalorder %s32, 7
      %p201 = por %p199, %p200
      %p202 = scmp.ne.s32.totalorder %s191, %s192
      %p203 = scmp.eq.s32.totalorder %s32, 0
      %p204 = por %p202, %p203
      %p205 = scmp.ne.s32.totalorder %s191, %s192
      %p206 = scmp.eq.s32.totalorder %s33, 7
      %p207 = por %p205, %p206
      %p209 = scmp.ne.s32.totalorder %s192, %s208
      %p210 = scmp.eq.s32.totalorder %s33, 0
      %p211 = por %p209, %p210
      %s212 = ssub.s32 %s36, %s45
      %p213 = scmp.eq.s32.totalorder %s212, 0
      %s215 = sadd.s32 %s214, 1
      %s216 = scalar_select %p213, %s214, %s215
      %p219 = pneg %p213
      %p220 = scmp.eq.s32.totalorder %s27, 7
      %p221 = por %p219, %p220
      %p222 = scmp.ne.s32.totalorder %s214, %s217
      %p223 = scmp.eq.s32.totalorder %s27, 0
      %p224 = por %p222, %p223
      %p225 = scmp.ne.s32.totalorder %s214, %s217
      %p226 = scmp.eq.s32.totalorder %s32, 7
      %p227 = por %p225, %p226
      %p228 = scmp.ne.s32.totalorder %s217, %s218
      %p229 = scmp.eq.s32.totalorder %s32, 0
      %p230 = por %p228, %p229
      %p231 = scmp.ne.s32.totalorder %s217, %s218
      %p232 = scmp.eq.s32.totalorder %s33, 7
      %p233 = por %p231, %p232
      %p235 = scmp.ne.s32.totalorder %s218, %s234
      %p236 = scmp.eq.s32.totalorder %s33, 0
      %p237 = por %p235, %p236
      %s238 = ssub.s32 %s36, %s45
      %p239 = scmp.eq.s32.totalorder %s238, 0
      %s241 = sadd.s32 %s240, 1
      %s242 = scalar_select %p239, %s240, %s241
      %p245 = pneg %p239
      %p246 = scmp.eq.s32.totalorder %s27, 7
      %p247 = por %p245, %p246
      %p248 = scmp.ne.s32.totalorder %s240, %s243
      %p249 = scmp.eq.s32.totalorder %s27, 0
      %p250 = por %p248, %p249
      %p251 = scmp.ne.s32.totalorder %s240, %s243
      %p252 = scmp.eq.s32.totalorder %s32, 7
      %p253 = por %p251, %p252
      %p254 = scmp.ne.s32.totalorder %s243, %s244
      %p255 = scmp.eq.s32.totalorder %s32, 0
      %p256 = por %p254, %p255
      %p257 = scmp.ne.s32.totalorder %s243, %s244
      %p258 = scmp.eq.s32.totalorder %s33, 7
      %p259 = por %p257, %p258
      %p261 = scmp.ne.s32.totalorder %s244, %s260
      %p262 = scmp.eq.s32.totalorder %s33, 0
      %p263 = por %p261, %p262
      %s264 = ssub.s32 %s36, %s45
      %p265 = scmp.eq.s32.totalorder %s264, 0
      %s267 = sadd.s32 %s266, 1
      %s268 = scalar_select %p265, %s266, %s267
      %p271 = pneg %p265
      %p272 = scmp.eq.s32.totalorder %s27, 7
      %p273 = por %p271, %p272
      %p274 = scmp.ne.s32.totalorder %s266, %s269
      %p275 = scmp.eq.s32.totalorder %s27, 0
      %p276 = por %p274, %p275
      %p277 = scmp.ne.s32.totalorder %s266, %s269
      %p278 = scmp.eq.s32.totalorder %s32, 7
      %p279 = por %p277, %p278
      %p280 = scmp.ne.s32.totalorder %s269, %s270
      %p281 = scmp.eq.s32.totalorder %s32, 0
      %p282 = por %p280, %p281
      %p283 = scmp.ne.s32.totalorder %s269, %s270
      %p284 = scmp.eq.s32.totalorder %s33, 7
      %p285 = por %p283, %p284
      %p287 = scmp.ne.s32.totalorder %s270, %s286
      %p288 = scmp.eq.s32.totalorder %s33, 0
      %p289 = por %p287, %p288
      %s291 = sadd.s32 %s290, 1
      %p294 = scmp.eq.s32.totalorder %s27, 7
      %p295 = scmp.ne.s32.totalorder %s290, %s292
      %p296 = scmp.eq.s32.totalorder %s27, 0
      %p297 = por %p295, %p296
      %p298 = scmp.ne.s32.totalorder %s290, %s292
      %p299 = scmp.eq.s32.totalorder %s32, 7
      %p300 = por %p298, %p299
      %p301 = scmp.ne.s32.totalorder %s292, %s293
      %p302 = scmp.eq.s32.totalorder %s32, 0
      %p303 = por %p301, %p302
      %p304 = scmp.ne.s32.totalorder %s292, %s293
      %p305 = scmp.eq.s32.totalorder %s33, 7
      %p306 = por %p304, %p305
      %p308 = scmp.ne.s32.totalorder %s293, %s307
      %p309 = scmp.eq.s32.totalorder %s33, 0
      %p310 = por %p308, %p309
      %s312 = sadd.s32 %s311, 1
      %p315 = scmp.eq.s32.totalorder %s27, 7
      %p316 = scmp.ne.s32.totalorder %s311, %s313
      %p317 = scmp.eq.s32.totalorder %s27, 0
      %p318 = por %p316, %p317
      %p319 = scmp.ne.s32.totalorder %s311, %s313
      %p320 = scmp.eq.s32.totalorder %s32, 7
      %p321 = por %p319, %p320
      %p322 = scmp.ne.s32.totalorder %s313, %s314
      %p323 = scmp.eq.s32.totalorder %s32, 0
      %p324 = por %p322, %p323
      %p325 = scmp.ne.s32.totalorder %s313, %s314
      %p326 = scmp.eq.s32.totalorder %s33, 7
      %p327 = por %p325, %p326
      %p329 = scmp.ne.s32.totalorder %s314, %s328
      %p330 = scmp.eq.s32.totalorder %s33, 0
      %p331 = por %p329, %p330
      %s333 = sadd.s32 %s332, 1
      %p336 = scmp.eq.s32.totalorder %s27, 7
      %p337 = scmp.ne.s32.totalorder %s332, %s334
      %p338 = scmp.eq.s32.totalorder %s27, 0
      %p339 = por %p337, %p338
      %p340 = scmp.ne.s32.totalorder %s332, %s334
      %p341 = scmp.eq.s32.totalorder %s32, 7
      %p342 = por %p340, %p341
      %p343 = scmp.ne.s32.totalorder %s334, %s335
      %p344 = scmp.eq.s32.totalorder %s32, 0
      %p345 = por %p343, %p344
      %p346 = scmp.ne.s32.totalorder %s334, %s335
      %p347 = scmp.eq.s32.totalorder %s33, 7
      %p348 = por %p346, %p347
      %p350 = scmp.ne.s32.totalorder %s335, %s349
      %p351 = scmp.eq.s32.totalorder %s33, 0
      %p352 = por %p350, %p351
      %s354 = sadd.s32 %s353, 1
      %p357 = scmp.eq.s32.totalorder %s27, 7
      %p358 = scmp.ne.s32.totalorder %s353, %s355
      %p359 = scmp.eq.s32.totalorder %s27, 0
      %p360 = por %p358, %p359
      %p361 = scmp.ne.s32.totalorder %s353, %s355
      %p362 = scmp.eq.s32.totalorder %s32, 7
      %p363 = por %p361, %p362
      %p364 = scmp.ne.s32.totalorder %s355, %s356
      %p365 = scmp.eq.s32.totalorder %s32, 0
      %p366 = por %p364, %p365
      %p367 = scmp.ne.s32.totalorder %s355, %s356
      %p368 = scmp.eq.s32.totalorder %s33, 7
      %p369 = por %p367, %p368
      %p371 = scmp.ne.s32.totalorder %s356, %s370
      %p372 = scmp.eq.s32.totalorder %s33, 0
      %p373 = por %p371, %p372
      %s375 = sadd.s32 %s374, 1
      %p378 = scmp.eq.s32.totalorder %s27, 7
      %p379 = scmp.ne.s32.totalorder %s374, %s376
      %p380 = scmp.eq.s32.totalorder %s27, 0
      %p381 = por %p379, %p380
      %p382 = scmp.ne.s32.totalorder %s374, %s376
      %p383 = scmp.eq.s32.totalorder %s32, 7
      %p384 = por %p382, %p383
      %p385 = scmp.ne.s32.totalorder %s376, %s377
      %p386 = scmp.eq.s32.totalorder %s32, 0
      %p387 = por %p385, %p386
      %p388 = scmp.ne.s32.totalorder %s376, %s377
      %p389 = scmp.eq.s32.totalorder %s33, 7
      %p390 = por %p388, %p389
      %p392 = scmp.ne.s32.totalorder %s377, %s391
      %p393 = scmp.eq.s32.totalorder %s33, 0
      %p394 = por %p392, %p393
      %s396 = sadd.s32 %s395, 1
      %p399 = scmp.eq.s32.totalorder %s27, 7
      %p400 = scmp.ne.s32.totalorder %s395, %s397
      %p401 = scmp.eq.s32.totalorder %s27, 0
      %p402 = por %p400, %p401
      %p403 = scmp.ne.s32.totalorder %s395, %s397
      %p404 = scmp.eq.s32.totalorder %s32, 7
      %p405 = por %p403, %p404
      %p406 = scmp.ne.s32.totalorder %s397, %s398
      %p407 = scmp.eq.s32.totalorder %s32, 0
      %p408 = por %p406, %p407
      %p409 = scmp.ne.s32.totalorder %s397, %s398
      %p410 = scmp.eq.s32.totalorder %s33, 7
      %p411 = por %p409, %p410
      %p413 = scmp.ne.s32.totalorder %s398, %s412
      %p414 = scmp.eq.s32.totalorder %s33, 0
      %p415 = por %p413, %p414
      %s417 = sadd.s32 %s416, 1
      %p420 = scmp.eq.s32.totalorder %s27, 7
      %p421 = scmp.ne.s32.totalorder %s416, %s418
      %p422 = scmp.eq.s32.totalorder %s27, 0
      %p423 = por %p421, %p422
      %p424 = scmp.ne.s32.totalorder %s416, %s418
      %p425 = scmp.eq.s32.totalorder %s32, 7
      %p426 = por %p424, %p425
      %p427 = scmp.ne.s32.totalorder %s418, %s419
      %p428 = scmp.eq.s32.totalorder %s32, 0
      %p429 = por %p427, %p428
      %p430 = scmp.ne.s32.totalorder %s418, %s419
      %p431 = scmp.eq.s32.totalorder %s33, 7
      %p432 = por %p430, %p431
      %p434 = scmp.ne.s32.totalorder %s419, %s433
      %p435 = scmp.eq.s32.totalorder %s33, 0
      %p436 = por %p434, %p435
      %s438 = sadd.s32 %s437, 1
      %p441 = scmp.eq.s32.totalorder %s27, 7
      %p442 = scmp.ne.s32.totalorder %s437, %s439
      %p443 = scmp.eq.s32.totalorder %s27, 0
      %p444 = por %p442, %p443
      %p445 = scmp.ne.s32.totalorder %s437, %s439
      %p446 = scmp.eq.s32.totalorder %s32, 7
      %p447 = por %p445, %p446
      %p448 = scmp.ne.s32.totalorder %s439, %s440
      %p449 = scmp.eq.s32.totalorder %s32, 0
      %p450 = por %p448, %p449
      %p451 = scmp.ne.s32.totalorder %s439, %s440
      %p452 = scmp.eq.s32.totalorder %s33, 7
      %p453 = por %p451, %p452
      %p455 = scmp.ne.s32.totalorder %s440, %s454
      %p456 = scmp.eq.s32.totalorder %s33, 0
      %p457 = por %p455, %p456
      %s459 = sadd.s32 %s458, 1
      %p462 = scmp.eq.s32.totalorder %s27, 7
      %p463 = scmp.ne.s32.totalorder %s458, %s460
      %p464 = scmp.eq.s32.totalorder %s27, 0
      %p465 = por %p463, %p464
      %p466 = scmp.ne.s32.totalorder %s458, %s460
      %p467 = scmp.eq.s32.totalorder %s32, 7
      %p468 = por %p466, %p467
      %p469 = scmp.ne.s32.totalorder %s460, %s461
      %p470 = scmp.eq.s32.totalorder %s32, 0
      %p471 = por %p469, %p470
      %p472 = scmp.ne.s32.totalorder %s460, %s461
      %p473 = scmp.eq.s32.totalorder %s33, 7
      %p474 = por %p472, %p473
      %p476 = scmp.ne.s32.totalorder %s461, %s475
      %p477 = scmp.eq.s32.totalorder %s33, 0
      %p478 = por %p476, %p477
      %s479 = ssub.s32 %s34, %s53
      %s480 = ssub.s32 %s35, %s49
      %s481 = sor.u32 %s479, %s480
      %p482 = scmp.eq.s32.totalorder %s481, 0
      %s484 = sadd.s32 %s483, 1
      %s485 = scalar_select %p482, %s483, %s484
      %p488 = pneg %p482
      %p489 = scmp.eq.s32.totalorder %s27, 7
      %p490 = por %p488, %p489
      %p491 = scmp.ne.s32.totalorder %s483, %s486
      %p492 = scmp.eq.s32.totalorder %s27, 0
      %p493 = por %p491, %p492
      %p494 = scmp.ne.s32.totalorder %s483, %s486
      %p495 = scmp.eq.s32.totalorder %s32, 7
      %p496 = por %p494, %p495
      %p497 = scmp.ne.s32.totalorder %s486, %s487
      %p498 = scmp.eq.s32.totalorder %s32, 0
      %p499 = por %p497, %p498
      %p500 = scmp.ne.s32.totalorder %s486, %s487
      %p501 = scmp.eq.s32.totalorder %s33, 7
      %p502 = por %p500, %p501
      %p504 = scmp.ne.s32.totalorder %s487, %s503
      %p505 = scmp.eq.s32.totalorder %s33, 0
      %p506 = por %p504, %p505
      %p507 = scmp.le.s32.totalorder 1, %s27
      %p508 = scmp.lt.s32.totalorder %s27, 9
      %p509 = pnand %p507, %p508
      %p510 = pneg %p509
      // Predicated region
      $region9: #{tpu_custom_call.1} parent=5 // pred_check
        _
      $region10: #{tpu_custom_call.1} parent=5 // pred_check_branch
        %512 = sbr.rel (%p509) target = $region12
      $region11: #{tpu_custom_call.1} parent=5 // pred_region
        %s513 = ssub.s32 %s27, 1
        // Predicated region
        $region13: #{tpu_custom_call.1} parent=11 // pred_check
          %p514 = pneg %p303
        $region14: #{tpu_custom_call.1} parent=11 // pred_check_branch
          %516 = sbr.rel (%p514) target = $region16
        $region15: #{tpu_custom_call.1} parent=11 // pred_region
          _
        $region16: #{tpu_custom_call.1} parent=11 // pred_fallthru
          _
        // Predicated region
        $region17: #{tpu_custom_call.1} parent=11 // pred_check
          %p517 = pneg %p324
        $region18: #{tpu_custom_call.1} parent=11 // pred_check_branch
          %519 = sbr.rel (%p517) target = $region20
        $region19: #{tpu_custom_call.1} parent=11 // pred_region
          _
        $region20: #{tpu_custom_call.1} parent=11 // pred_fallthru
          _
        // Predicated region
        $region21: #{tpu_custom_call.1} parent=11 // pred_check
          %p520 = pneg %p345
        $region22: #{tpu_custom_call.1} parent=11 // pred_check_branch
          %522 = sbr.rel (%p520) target = $region24
        $region23: #{tpu_custom_call.1} parent=11 // pred_region
          _
        $region24: #{tpu_custom_call.1} parent=11 // pred_fallthru
          _
        // Predicated region
        $region25: #{tpu_custom_call.1} parent=11 // pred_check
          %p523 = pneg %p366
        $region26: #{tpu_custom_call.1} parent=11 // pred_check_branch
          %525 = sbr.rel (%p523) target = $region28
        $region27: #{tpu_custom_call.1} parent=11 // pred_region
          _
        $region28: #{tpu_custom_call.1} parent=11 // pred_fallthru
          _
        // Predicated region
        $region29: #{tpu_custom_call.1} parent=11 // pred_check
          %p526 = pneg %p387
        $region30: #{tpu_custom_call.1} parent=11 // pred_check_branch
          %528 = sbr.rel (%p526) target = $region32
        $region31: #{tpu_custom_call.1} parent=11 // pred_region
          _
        $region32: #{tpu_custom_call.1} parent=11 // pred_fallthru
          _
        // Predicated region
        $region33: #{tpu_custom_call.1} parent=11 // pred_check
          %p529 = pneg %p408
        $region34: #{tpu_custom_call.1} parent=11 // pred_check_branch
          %531 = sbr.rel (%p529) target = $region36
        $region35: #{tpu_custom_call.1} parent=11 // pred_region
          _
        $region36: #{tpu_custom_call.1} parent=11 // pred_fallthru
          _
        // Predicated region
        $region37: #{tpu_custom_call.1} parent=11 // pred_check
          %p532 = pneg %p429
        $region38: #{tpu_custom_call.1} parent=11 // pred_check_branch
          %534 = sbr.rel (%p532) target = $region40
        $region39: #{tpu_custom_call.1} parent=11 // pred_region
          _
        $region40: #{tpu_custom_call.1} parent=11 // pred_fallthru
          _
        // Predicated region
        $region41: #{tpu_custom_call.1} parent=11 // pred_check
          %p535 = pneg %p450
        $region42: #{tpu_custom_call.1} parent=11 // pred_check_branch
          %537 = sbr.rel (%p535) target = $region44
        $region43: #{tpu_custom_call.1} parent=11 // pred_region
          _
        $region44: #{tpu_custom_call.1} parent=11 // pred_fallthru
          _
        // Predicated region
        $region45: #{tpu_custom_call.1} parent=11 // pred_check
          %p538 = pneg %p471
        $region46: #{tpu_custom_call.1} parent=11 // pred_check_branch
          %540 = sbr.rel (%p538) target = $region48
        $region47: #{tpu_custom_call.1} parent=11 // pred_region
          _
        $region48: #{tpu_custom_call.1} parent=11 // pred_fallthru
          _
      $region12: #{tpu_custom_call.1} parent=5 // pred_fallthru
        _
      %p541 = scmp.lt.s32.totalorder %s27, 8
      // Predicated region
      $region49: #{tpu_custom_call.1} parent=5 // pred_check
        %p542 = pneg %p541
      $region50: #{tpu_custom_call.1} parent=5 // pred_check_branch
        %544 = sbr.rel (%p542) target = $region52
      $region51: #{tpu_custom_call.1} parent=5 // pred_region
        // Predicated region
        $region53: #{tpu_custom_call.1} parent=51 // pred_check
          %p545 = pneg %p68
        $region54: #{tpu_custom_call.1} parent=51 // pred_check_branch
          %547 = sbr.rel (%p545) target = $region56
        $region55: #{tpu_custom_call.1} parent=51 // pred_region
          %p548 = scmp.lt.s32.totalorder %s34, 1
          %s549 = scalar_select %p548, %s34, 1
          %p550 = scmp.lt.s32.totalorder %s35, 0
          %s551 = scalar_select %p550, %s35, 0
          %s552 = sadd.s32 %s551, %s549
          %s553 = smul.addr %s552, 8
          %s554 = scalar_lea.vmem %s0, %s553
        $region56: #{tpu_custom_call.1} parent=51 // pred_fallthru
          _
        // Predicated region
        $region57: #{tpu_custom_call.1} parent=51 // pred_check
          %p555 = pneg %p94
        $region58: #{tpu_custom_call.1} parent=51 // pred_check_branch
          %557 = sbr.rel (%p555) target = $region60
        $region59: #{tpu_custom_call.1} parent=51 // pred_region
          %p558 = scmp.lt.s32.totalorder %s34, 1
          %s559 = scalar_select %p558, %s34, 1
          %s560 = smul.addr %s559, 8
          %s561 = scalar_lea.vmem %s1, %s560
        $region60: #{tpu_custom_call.1} parent=51 // pred_fallthru
          _
        // Predicated region
        $region61: #{tpu_custom_call.1} parent=51 // pred_check
          %p562 = pneg %p120
        $region62: #{tpu_custom_call.1} parent=51 // pred_check_branch
          %564 = sbr.rel (%p562) target = $region64
        $region63: #{tpu_custom_call.1} parent=51 // pred_region
          %p565 = scmp.lt.s32.totalorder %s36, 3
          %s566 = scalar_select %p565, %s36, 3
          %s567 = smul.addr %s566, 4
          %s568 = smul.addr %s567, 4
          %s569 = scalar_lea.vmem %s2, %s568
        $region64: #{tpu_custom_call.1} parent=51 // pred_fallthru
          _
        // Predicated region
        $region65: #{tpu_custom_call.1} parent=51 // pred_check
          %p570 = pneg %p146
        $region66: #{tpu_custom_call.1} parent=51 // pred_check_branch
          %572 = sbr.rel (%p570) target = $region68
        $region67: #{tpu_custom_call.1} parent=51 // pred_region
          %p573 = scmp.lt.s32.totalorder %s36, 3
          %s574 = scalar_select %p573, %s36, 3
          %s575 = smul.addr %s574, 4
          %s576 = smul.addr %s575, 4
          %s577 = scalar_lea.vmem %s3, %s576
        $region68: #{tpu_custom_call.1} parent=51 // pred_fallthru
          _
        // Predicated region
        $region69: #{tpu_custom_call.1} parent=51 // pred_check
          %p578 = pneg %p172
        $region70: #{tpu_custom_call.1} parent=51 // pred_check_branch
          %580 = sbr.rel (%p578) target = $region72
        $region71: #{tpu_custom_call.1} parent=51 // pred_region
          %p581 = scmp.lt.s32.totalorder %s36, 3
          %s582 = scalar_select %p581, %s36, 3
          %s583 = smul.addr %s582, 4
          %s584 = smul.addr %s583, 4
          %s585 = scalar_lea.vmem %s4, %s584
        $region72: #{tpu_custom_call.1} parent=51 // pred_fallthru
          _
        // Predicated region
        $region73: #{tpu_custom_call.1} parent=51 // pred_check
          %p586 = pneg %p198
        $region74: #{tpu_custom_call.1} parent=51 // pred_check_branch
          %588 = sbr.rel (%p586) target = $region76
        $region75: #{tpu_custom_call.1} parent=51 // pred_region
          %p589 = scmp.lt.s32.totalorder %s36, 3
          %s590 = scalar_select %p589, %s36, 3
          %s591 = scalar_lea.vmem %s5, %s590
        $region76: #{tpu_custom_call.1} parent=51 // pred_fallthru
          _
        // Predicated region
        $region77: #{tpu_custom_call.1} parent=51 // pred_check
          %p592 = pneg %p224
        $region78: #{tpu_custom_call.1} parent=51 // pred_check_branch
          %594 = sbr.rel (%p592) target = $region80
        $region79: #{tpu_custom_call.1} parent=51 // pred_region
          %p595 = scmp.lt.s32.totalorder %s36, 3
          %s596 = scalar_select %p595, %s36, 3
          %s597 = scalar_lea.vmem %s6, %s596
        $region80: #{tpu_custom_call.1} parent=51 // pred_fallthru
          _
        // Predicated region
        $region81: #{tpu_custom_call.1} parent=51 // pred_check
          %p598 = pneg %p250
        $region82: #{tpu_custom_call.1} parent=51 // pred_check_branch
          %600 = sbr.rel (%p598) target = $region84
        $region83: #{tpu_custom_call.1} parent=51 // pred_region
          %p601 = scmp.lt.s32.totalorder %s36, 3
          %s602 = scalar_select %p601, %s36, 3
          %s603 = scalar_lea.vmem %s7, %s602
        $region84: #{tpu_custom_call.1} parent=51 // pred_fallthru
          _
        // Predicated region
        $region85: #{tpu_custom_call.1} parent=51 // pred_check
          %p604 = pneg %p276
        $region86: #{tpu_custom_call.1} parent=51 // pred_check_branch
          %606 = sbr.rel (%p604) target = $region88
        $region87: #{tpu_custom_call.1} parent=51 // pred_region
          %p607 = scmp.lt.s32.totalorder %s36, 3
          %s608 = scalar_select %p607, %s36, 3
          %s609 = smul.addr %s608, 4
          %s610 = scalar_lea.vmem %s8, %s609
        $region88: #{tpu_custom_call.1} parent=51 // pred_fallthru
          _
      $region52: #{tpu_custom_call.1} parent=5 // pred_fallthru
        _
      %p611 = scmp.le.s32.totalorder 1, %s27
      %p612 = scmp.lt.s32.totalorder %s27, 9
      %p613 = pnand %p611, %p612
      %p614 = pneg %p613
      // Predicated region
      $region89: #{tpu_custom_call.1} parent=5 // pred_check
        _
      $region90: #{tpu_custom_call.1} parent=5 // pred_check_branch
        %616 = sbr.rel (%p613) target = $region92
      $region91: #{tpu_custom_call.1} parent=5 // pred_region
        %s617 = ssub.s32 %s27, 1
        %p618 = scmp.lt.s32.totalorder %s37, 1
        %s619 = scalar_select %p618, %s37, 1
        %p620 = scmp.lt.s32.totalorder %s38, 0
        %s621 = scalar_select %p620, %s38, 0
        %s622 = sadd.s32 %s621, %s619
        %s623 = smul.addr %s622, 8
        %s624 = scalar_lea.vmem %s0, %s623
        %p625 = pneg %p74
        %p626 = pneg %p71
        %p627 = scmp.lt.s32.totalorder %s37, 1
        %s628 = scalar_select %p627, %s37, 1
        %s629 = smul.addr %s628, 8
        %s630 = scalar_lea.vmem %s1, %s629
        %p631 = pneg %p100
        %p632 = pneg %p97
        %p633 = scmp.lt.s32.totalorder %s39, 3
        %s634 = scalar_select %p633, %s39, 3
        %s635 = smul.addr %s634, 4
        %s636 = smul.addr %s635, 4
        %s637 = scalar_lea.vmem %s2, %s636
        %p638 = pneg %p126
        %p639 = pneg %p123
        %p640 = scmp.lt.s32.totalorder %s39, 3
        %s641 = scalar_select %p640, %s39, 3
        %s642 = smul.addr %s641, 4
        %s643 = smul.addr %s642, 4
        %s644 = scalar_lea.vmem %s3, %s643
        %p645 = pneg %p152
        %p646 = pneg %p149
        %p647 = scmp.lt.s32.totalorder %s39, 3
        %s648 = scalar_select %p647, %s39, 3
        %s649 = smul.addr %s648, 4
        %s650 = smul.addr %s649, 4
        %s651 = scalar_lea.vmem %s4, %s650
        %p652 = pneg %p178
        %p653 = pneg %p175
        %p654 = scmp.lt.s32.totalorder %s39, 3
        %s655 = scalar_select %p654, %s39, 3
        %s656 = scalar_lea.vmem %s5, %s655
        %p657 = pneg %p204
        %p658 = pneg %p201
        %p659 = scmp.lt.s32.totalorder %s39, 3
        %s660 = scalar_select %p659, %s39, 3
        %s661 = scalar_lea.vmem %s6, %s660
        %p662 = pneg %p230
        %p663 = pneg %p227
        %p664 = scmp.lt.s32.totalorder %s39, 3
        %s665 = scalar_select %p664, %s39, 3
        %s666 = scalar_lea.vmem %s7, %s665
        %p667 = pneg %p256
        %p668 = pneg %p253
        %p669 = scmp.lt.s32.totalorder %s39, 3
        %s670 = scalar_select %p669, %s39, 3
        %s671 = smul.addr %s670, 4
        %s672 = scalar_lea.vmem %s8, %s671
        %p673 = pneg %p282
        %p674 = pneg %p279
        %p675 = pneg %p303
        %p676 = pneg %p300
        %p677 = pneg %p324
        %p678 = pneg %p321
        %p679 = pneg %p345
        %p680 = pneg %p342
        %p681 = pneg %p366
        %p682 = pneg %p363
        %p683 = pneg %p387
        %p684 = pneg %p384
        %p685 = pneg %p408
        %p686 = pneg %p405
        %p687 = pneg %p429
        %p688 = pneg %p426
        %p689 = pneg %p450
        %p690 = pneg %p447
        %p691 = pneg %p471
        %p692 = pneg %p468
        %p693 = pneg %p499
        %p694 = pneg %p496
        %s695 = sand.u32 %s486, 1
        %s696 = scalar_lea.sflag [#allocation4], %s695
        %s697 = sand.u32 %s486, 1
        %s698 = smul.addr %s697, 8
        %s699 = scalar_lea.vmem [#allocation3], %s698
        %p700 = scmp.lt.s32.totalorder %s37, 1
        %s701 = scalar_select %p700, %s37, 1
        %p702 = scmp.lt.s32.totalorder %s38, 0
        %s703 = scalar_select %p702, %s38, 0
        %s704 = sadd.s32 %s703, %s701
        %s705 = smul.addr %s704, 8
        %s706 = scalar_lea.vmem %s0, %s705
        %p707 = scmp.lt.s32.totalorder %s37, 1
        %s708 = scalar_select %p707, %s37, 1
        %s709 = smul.addr %s708, 8
        %s710 = scalar_lea.vmem %s1, %s709
        %p711 = scmp.lt.s32.totalorder %s39, 3
        %s712 = scalar_select %p711, %s39, 3
        %s713 = smul.addr %s712, 4
        %s714 = smul.addr %s713, 4
        %s715 = scalar_lea.vmem %s2, %s714
        %p716 = scmp.lt.s32.totalorder %s39, 3
        %s717 = scalar_select %p716, %s39, 3
        %s718 = smul.addr %s717, 4
        %s719 = smul.addr %s718, 4
        %s720 = scalar_lea.vmem %s3, %s719
        %p721 = scmp.lt.s32.totalorder %s39, 3
        %s722 = scalar_select %p721, %s39, 3
        %s723 = smul.addr %s722, 4
        %s724 = smul.addr %s723, 4
        %s725 = scalar_lea.vmem %s4, %s724
        %p726 = scmp.lt.s32.totalorder %s39, 3
        %s727 = scalar_select %p726, %s39, 3
        %s728 = scalar_lea.vmem %s5, %s727
        %p729 = scmp.lt.s32.totalorder %s39, 3
        %s730 = scalar_select %p729, %s39, 3
        %s731 = scalar_lea.vmem %s6, %s730
        %p732 = scmp.lt.s32.totalorder %s39, 3
        %s733 = scalar_select %p732, %s39, 3
        %s734 = scalar_lea.vmem %s7, %s733
        %p735 = scmp.lt.s32.totalorder %s39, 3
        %s736 = scalar_select %p735, %s39, 3
        %s737 = smul.addr %s736, 4
        %s738 = scalar_lea.vmem %s8, %s737
        %p740 = scmp.eq.s32.totalorder %s39, 0
        // Predicated region
        $region93: #{tpu_custom_call.1} parent=91 // pred_check
          %p741 = pneg %p740
        $region94: #{tpu_custom_call.1} parent=91 // pred_check_branch
          %743 = sbr.rel (%p741) target = $region96
        $region95: #{tpu_custom_call.1} parent=91 // pred_region
          %vm744 = vcmask 261120
          %745 = vst.msk [vmem:[#allocation2] sm:$0xff] %vm744, 0.0
        $region96: #{tpu_custom_call.1} parent=91 // pred_fallthru
          _
        %v746 = vld [vmem:[%s706] sm:$0xff]
        %v747 = vld [vmem:[%s710] sm:$0xff]
        %v748 = vpack.c.bf16 %v746, %v746
        %v749 = vpack.c.bf16 %v747, %v747
        %v750 = vld [vmem:[%s715] sm:$0xf]
        %v751 = vld [vmem:[%s715 + $0x4] sm:$0xf]
        %v752 = vld [vmem:[%s715 + $0x8] sm:$0xf]
        %v753 = vld [vmem:[%s715 + $0xc] sm:$0xf]
        %v754 = vld [vmem:[%s728] sm:$0x1]
        %v756 = vperm.slane %v754, 0
        %v762 = vunpack.c.l.b16 %v750
        %v763 = vunpack.c.l.b16 %v751
        %v764 = vunpack.c.l.b16 %v752
        %v765 = vunpack.c.l.b16 %v753
        %v766 = vpack.c.b16 %v763, %v762
        %v767 = vpack.c.b16 %v765, %v764
        %vm770 = vcmask 261120
        %v772 = vsel %vm770, %v748, 0
        %774 = vmatpush.bf16.msra.mxu0 0
        %775 = vmatpush.bf16.msra.mxu0 0
        %776 = vmatpush.bf16.msra.mxu0 0
        %777 = vmatpush.bf16.msra.mxu0 0
        %778 = vmatpush.bf16.msra.mxu0 0
        %779 = vmatpush.bf16.msra.mxu0 0
        %780 = vmatpush.bf16.msra.mxu0 %v767
        %781 = vmatpush.bf16.msra.mxu0 %v766
        %782 = vmatmul.bf16.gmra.mxu0 %v772
        %v783 = vpop.f32.mrf.mxu0
        %v784 = vadd.f32 %v756, %v783
        %v785 = vpop.f32.mrf.mxu0
        %786 = vdwg.mxu0
        %v787 = vld [vmem:[%s720] sm:$0xf]
        %v788 = vld [vmem:[%s720 + $0x4] sm:$0xf]
        %v789 = vld [vmem:[%s720 + $0x8] sm:$0xf]
        %v790 = vld [vmem:[%s720 + $0xc] sm:$0xf]
        %v791 = vld [vmem:[%s731] sm:$0x1]
        %v793 = vperm.slane %v791, 0
        %v799 = vunpack.c.l.b16 %v787
        %v800 = vunpack.c.l.b16 %v788
        %v801 = vunpack.c.l.b16 %v789
        %v802 = vunpack.c.l.b16 %v790
        %v803 = vpack.c.b16 %v800, %v799
        %v804 = vpack.c.b16 %v802, %v801
        %v808 = vsel %vm770, %v749, 0
        %810 = vmatpush.bf16.msra.mxu0 0
        %811 = vmatpush.bf16.msra.mxu0 0
        %812 = vmatpush.bf16.msra.mxu0 0
        %813 = vmatpush.bf16.msra.mxu0 0
        %814 = vmatpush.bf16.msra.mxu0 0
        %815 = vmatpush.bf16.msra.mxu0 0
        %816 = vmatpush.bf16.msra.mxu0 %v804
        %817 = vmatpush.bf16.msra.mxu0 %v803
        %818 = vmatmul.bf16.gmra.mxu0 %v808
        %v819 = vpop.f32.mrf.mxu0
        %v820 = vadd.f32 %v793, %v819
        %v821 = vpop.f32.mrf.mxu0
        %822 = vdwg.mxu0
        %v823 = vld [vmem:[%s725] sm:$0xf]
        %v824 = vld [vmem:[%s725 + $0x4] sm:$0xf]
        %v825 = vld [vmem:[%s725 + $0x8] sm:$0xf]
        %v826 = vld [vmem:[%s725 + $0xc] sm:$0xf]
        %v827 = vld [vmem:[%s734] sm:$0x1]
        %v829 = vperm.slane %v827, 0
        %v835 = vunpack.c.l.b16 %v823
        %v836 = vunpack.c.l.b16 %v824
        %v837 = vunpack.c.l.b16 %v825
        %v838 = vunpack.c.l.b16 %v826
        %v839 = vpack.c.b16 %v836, %v835
        %v840 = vpack.c.b16 %v838, %v837
        %843 = vmatpush.bf16.msra.mxu0 0
        %844 = vmatpush.bf16.msra.mxu0 0
        %845 = vmatpush.bf16.msra.mxu0 0
        %846 = vmatpush.bf16.msra.mxu0 0
        %847 = vmatpush.bf16.msra.mxu0 0
        %848 = vmatpush.bf16.msra.mxu0 0
        %849 = vmatpush.bf16.msra.mxu0 %v840
        %850 = vmatpush.bf16.msra.mxu0 %v839
        %851 = vmatmul.bf16.gmra.mxu0 %v808
        %v852 = vpop.f32.mrf.mxu0
        %v853 = vadd.f32 %v829, %v852
        %v854 = vpop.f32.mrf.mxu0
        %855 = vdwg.mxu0
        %v856 = vpack.c.bf16 %v784, %v784
        %v857 = vpack.c.bf16 %v820, %v820
        %vm858 = vcmask 64512
        %v860 = vsel %vm858, %v856, 0
        %v863 = vsel %vm858, %v857, 0
        %865 = vmatpush.bf16.xpose.msra.mxu0 0
        %866 = vmatpush.bf16.xpose.msra.mxu0 0
        %867 = vmatpush.bf16.xpose.msra.mxu0 0
        %868 = vmatpush.bf16.xpose.msra.mxu0 0
        %869 = vmatpush.bf16.xpose.msra.mxu0 0
        %870 = vmatpush.bf16.xpose.msra.mxu0 0
        %871 = vmatpush.bf16.xpose.msra.mxu0 0
        %872 = vmatpush.bf16.xpose.msra.mxu0 %v863
        %873 = vmatmul.bf16.gmra.mxu0 %v860
        %v874 = vpop.f32.mrf.mxu0
        %v875 = vadd.f32 0.0, %v874
        %v876 = vpop.f32.mrf.mxu0
        %877 = vdwg.mxu0
        %v878 = vmul.f32 %v875, 0.35355338
        %s879 = smul.u32 %s38, 8
        %v880 = vlaneseq
        %v881 = vshrl.u32 %v880, 7
        %v882 = vstv %s879
        %v883 = vadd.s32 %v882, %v881
        %v884 = vlaneseq
        %v885 = vand.u32 %v884, 127
        %vm886 = vcmp.gt.s32.totalorder %v885, %v883
        %v887 = vsel %vm886, -1e+30, %v878
        %v888 = vsel %vm858, %v887, -inf
        %889 = vmax.xlane.f32.xlu0 %v888
        %v890 = vpop.xlane.xlu0 %889
        %v891 = vsub.f32 %v887, %v890
        %v892 = vmul.f32 %v891, 1.442695
        %v893 = vpow.pop %v892
        %v894 = vsel %vm858, %v893, 0.0
        %895 = vadd.xlane.f32.xlu0 %v894
        %v896 = vpop.xlane.xlu0 %895
        %v897 = vrcp.pop %v896
        %v898 = vmul.f32 %v893, %v897
        %v899 = vpack.c.bf16 %v898, %v898
        %v900 = vpack.c.bf16 %v853, %v853
        %v902 = vsel %vm858, %v899, 0
        %vm904 = vcmask 1043456
        %v906 = vsel %vm904, %v900, 0
        %908 = vmatpush.bf16.msra.mxu0 0
        %909 = vmatpush.bf16.msra.mxu0 0
        %910 = vmatpush.bf16.msra.mxu0 0
        %911 = vmatpush.bf16.msra.mxu0 0
        %912 = vmatpush.bf16.msra.mxu0 0
        %913 = vmatpush.bf16.msra.mxu0 0
        %914 = vmatpush.bf16.msra.mxu0 0
        %915 = vmatpush.bf16.msra.mxu0 %v906
        %916 = vmatmul.bf16.gmra.mxu0 %v902
        %v917 = vpop.f32.mrf.mxu0
        %v918 = vadd.f32 0.0, %v917
        %v919 = vpop.f32.mrf.mxu0
        %920 = vdwg.mxu0
        %v921 = vld [vmem:[#allocation2] sm:$0xff]
        %v922 = vpack.c.bf16 %v918, %v918
        %v923 = vld [vmem:[%s738] sm:$0xf]
        %v925 = vsel %vm858, %v922, 0
        %v928 = vsel %vm904, %v923, 0
        %930 = vmatpush.bf16.msra.mxu0 0
        %931 = vmatpush.bf16.msra.mxu0 0
        %932 = vmatpush.bf16.msra.mxu0 0
        %933 = vmatpush.bf16.msra.mxu0 0
        %934 = vmatpush.bf16.msra.mxu0 0
        %935 = vmatpush.bf16.msra.mxu0 0
        %936 = vmatpush.bf16.msra.mxu0 0
        %937 = vmatpush.bf16.msra.mxu0 %v928
        %938 = vmatmul.bf16.gmra.mxu0 %v925
        %v939 = vpop.f32.mrf.mxu0
        %v940 = vadd.f32 0.0, %v939
        %v941 = vpop.f32.mrf.mxu0
        %942 = vdwg.mxu0
        %v943 = vadd.f32 %v921, %v940
        %944 = vst.msk [vmem:[#allocation2] sm:$0xff] %vm770, %v943
        %p945 = scmp.eq.s32.totalorder %s39, 3
        // Predicated region
        $region97: #{tpu_custom_call.1} parent=91 // pred_check
          %p946 = pneg %p945
        $region98: #{tpu_custom_call.1} parent=91 // pred_check_branch
          %948 = sbr.rel (%p946) target = $region100
        $region99: #{tpu_custom_call.1} parent=91 // pred_region
          %v949 = vld [vmem:[#allocation2] sm:$0xff]
          %v950 = vld [vmem:[%s9] sm:$0x1]
          %v952 = vperm.slane %v950, 0
          %v954 = vadd.f32 %v949, %v952
          %v955 = vadd.f32 %v746, %v954
          %v956 = vld [vmem:[%s10] sm:$0x1]
          %v957 = vld [vmem:[%s11] sm:$0x1]
          %v958 = vsel %vm770, %v955, 0.0
          %959 = vadd.xlane.f32.xlu0 %v958
          %v960 = vpop.xlane.xlu0 %959
          %v961 = vrcp.pop 32.0
          %v962 = vmul.f32 32.0, %v961
          %v963 = vsub.f32 1.0, %v962
          %v964 = vmul.f32 %v961, %v963
          %v965 = vadd.f32 %v961, %v964
          %vm966 = vweird.f32 %v961
          %v967 = vsel %vm966, %v961, %v965
          %v968 = vmul.f32 %v960, %v967
          %v969 = vsub.f32 %v955, %v968
          %v970 = vmul.f32 %v969, %v969
          %v971 = vsel %vm770, %v970, 0.0
          %972 = vadd.xlane.f32.xlu0 %v971
          %v973 = vpop.xlane.xlu0 %972
          %v974 = vmul.f32 %v973, %v967
          %v975 = vadd.f32 %v974, 1e-05
          %v976 = vrsqrt.pop %v975
          %v977 = vmul.f32 %v976, %v975
          %v978 = vmul.f32 %v977, %v976
          %v979 = vmul.f32 0.5, %v978
          %v980 = vsub.f32 1.5, %v979
          %v981 = vmul.f32 %v976, %v980
          %vm982 = vweird.f32 %v975
          %vm983 = vweird.f32 %v976
          %vm984 = vmor %vm982, %vm983
          %v985 = vsel %vm984, %v976, %v981
          %v986 = vmul.f32 %v969, %v985
          %v988 = vperm.slane %v956, 0
          %v990 = vmul.f32 %v986, %v988
          %v992 = vperm.slane %v957, 0
          %v994 = vadd.f32 %v990, %v992
          %v995 = vpack.c.bf16 %v994, %v994
          %v996 = vld [vmem:[%s12] sm:$0xf]
          %v997 = vld [vmem:[%s12 + $0x4] sm:$0xf]
          %v998 = vld [vmem:[%s12 + $0x8] sm:$0xf]
          %v999 = vld [vmem:[%s12 + $0xc] sm:$0xf]
          %v1000 = vld [vmem:[%s13] sm:$0x1]
          %v1002 = vperm.slane %v1000, 0
          %v1008 = vunpack.c.l.b16 %v996
          %v1009 = vunpack.c.l.b16 %v997
          %v1010 = vunpack.c.l.b16 %v998
          %v1011 = vunpack.c.l.b16 %v999
          %v1012 = vpack.c.b16 %v1009, %v1008
          %v1013 = vpack.c.b16 %v1011, %v1010
          %v1017 = vsel %vm770, %v995, 0
          %1019 = vmatpush.bf16.msra.mxu0 0
          %1020 = vmatpush.bf16.msra.mxu0 0
          %1021 = vmatpush.bf16.msra.mxu0 0
          %1022 = vmatpush.bf16.msra.mxu0 0
          %1023 = vmatpush.bf16.msra.mxu0 0
          %1024 = vmatpush.bf16.msra.mxu0 0
          %1025 = vmatpush.bf16.msra.mxu0 %v1013
          %1026 = vmatpush.bf16.msra.mxu0 %v1012
          %1027 = vmatmul.bf16.gmra.mxu0 %v1017
          %v1028 = vpop.f32.mrf.mxu0
          %v1029 = vadd.f32 %v1002, %v1028
          %v1030 = vpop.f32.mrf.mxu0
          %1031 = vdwg.mxu0
          %v1032 = vmax.f32 %v1029, 0.0
          %v1033 = vpack.c.bf16 %v1032, %v1032
          %v1034 = vld [vmem:[%s14] sm:$0xf]
          %v1035 = vld [vmem:[%s14 + $0x4] sm:$0xf]
          %v1036 = vld [vmem:[%s14 + $0x8] sm:$0xf]
          %v1037 = vld [vmem:[%s14 + $0xc] sm:$0xf]
          %v1038 = vld [vmem:[%s14 + $0x10] sm:$0xf]
          %v1039 = vld [vmem:[%s14 + $0x14] sm:$0xf]
          %v1040 = vld [vmem:[%s14 + $0x18] sm:$0xf]
          %v1041 = vld [vmem:[%s14 + $0x1c] sm:$0xf]
          %v1042 = vld [vmem:[%s14 + $0x20] sm:$0xf]
          %v1043 = vld [vmem:[%s14 + $0x24] sm:$0xf]
          %v1044 = vld [vmem:[%s14 + $0x28] sm:$0xf]
          %v1045 = vld [vmem:[%s14 + $0x2c] sm:$0xf]
          %v1046 = vld [vmem:[%s14 + $0x30] sm:$0xf]
          %v1047 = vld [vmem:[%s14 + $0x34] sm:$0xf]
          %v1048 = vld [vmem:[%s14 + $0x38] sm:$0xf]
          %v1049 = vld [vmem:[%s14 + $0x3c] sm:$0xf]
          %v1050 = vld [vmem:[%s15] sm:$0x1]
          %v1052 = vperm.slane %v1050, 0
          %v1070 = vunpack.c.l.b16 %v1034
          %v1071 = vunpack.c.l.b16 %v1035
          %v1072 = vunpack.c.l.b16 %v1036
          %v1073 = vunpack.c.l.b16 %v1037
          %v1074 = vunpack.c.l.b16 %v1038
          %v1075 = vunpack.c.l.b16 %v1039
          %v1076 = vunpack.c.l.b16 %v1040
          %v1077 = vunpack.c.l.b16 %v1041
          %v1078 = vunpack.c.l.b16 %v1042
          %v1079 = vunpack.c.l.b16 %v1043
          %v1080 = vunpack.c.l.b16 %v1044
          %v1081 = vunpack.c.l.b16 %v1045
          %v1082 = vunpack.c.l.b16 %v1046
          %v1083 = vunpack.c.l.b16 %v1047
          %v1084 = vunpack.c.l.b16 %v1048
          %v1085 = vunpack.c.l.b16 %v1049
          %v1086 = vpack.c.b16 %v1071, %v1070
          %v1087 = vpack.c.b16 %v1073, %v1072
          %v1088 = vpack.c.b16 %v1075, %v1074
          %v1089 = vpack.c.b16 %v1077, %v1076
          %v1090 = vpack.c.b16 %v1079, %v1078
          %v1091 = vpack.c.b16 %v1081, %v1080
          %v1092 = vpack.c.b16 %v1083, %v1082
          %v1093 = vpack.c.b16 %v1085, %v1084
          %1102 = vmatpush.bf16.msra.mxu0 %v1093
          %1103 = vmatpush.bf16.msra.mxu0 %v1092
          %1104 = vmatpush.bf16.msra.mxu0 %v1091
          %1105 = vmatpush.bf16.msra.mxu0 %v1090
          %1106 = vmatpush.bf16.msra.mxu0 %v1089
          %1107 = vmatpush.bf16.msra.mxu0 %v1088
          %1108 = vmatpush.bf16.msra.mxu0 %v1087
          %1109 = vmatpush.bf16.msra.mxu0 %v1086
          %1110 = vmatmul.bf16.gmra.mxu0 %v1033
          %v1111 = vpop.f32.mrf.mxu0
          %v1112 = vadd.f32 %v1052, %v1111
          %v1113 = vpop.f32.mrf.mxu0
          %1114 = vdwg.mxu0
          %v1115 = vadd.f32 %v994, %v1112
          %v1116 = vld [vmem:[%s16] sm:$0x1]
          %v1117 = vld [vmem:[%s17] sm:$0x1]
          %v1118 = vsel %vm770, %v1115, 0.0
          %1119 = vadd.xlane.f32.xlu0 %v1118
          %v1120 = vpop.xlane.xlu0 %1119
          %v1121 = vmul.f32 %v1120, %v967
          %v1122 = vsub.f32 %v1115, %v1121
          %v1123 = vmul.f32 %v1122, %v1122
          %v1124 = vsel %vm770, %v1123, 0.0
          %1125 = vadd.xlane.f32.xlu0 %v1124
          %v1126 = vpop.xlane.xlu0 %1125
          %v1127 = vmul.f32 %v1126, %v967
          %v1128 = vadd.f32 %v1127, 1e-05
          %v1129 = vrsqrt.pop %v1128
          %v1130 = vmul.f32 %v1129, %v1128
          %v1131 = vmul.f32 %v1130, %v1129
          %v1132 = vmul.f32 0.5, %v1131
          %v1133 = vsub.f32 1.5, %v1132
          %v1134 = vmul.f32 %v1129, %v1133
          %vm1135 = vweird.f32 %v1128
          %vm1136 = vweird.f32 %v1129
          %vm1137 = vmor %vm1135, %vm1136
          %v1138 = vsel %vm1137, %v1129, %v1134
          %v1139 = vmul.f32 %v1122, %v1138
          %v1141 = vperm.slane %v1116, 0
          %v1143 = vmul.f32 %v1139, %v1141
          %v1145 = vperm.slane %v1117, 0
          %v1147 = vadd.f32 %v1143, %v1145
          %1148 = vst.msk [vmem:[%s699] sm:$0xff] %vm770, %v1147
        $region100: #{tpu_custom_call.1} parent=91 // pred_fallthru
          _
        %s1149 = sand.u32 %s486, 1
        %s1150 = scalar_lea.sflag [#allocation4], %s1149
        %s1151 = sand.u32 %s486, 1
        %s1152 = smul.addr %s1151, 8
        %s1153 = scalar_lea.vmem [#allocation3], %s1152
        // Predicated region
        $region101: #{tpu_custom_call.1} parent=91 // pred_check
          %p1154 = pneg %p496
        $region102: #{tpu_custom_call.1} parent=91 // pred_check_branch
          %1156 = sbr.rel (%p1154) target = $region104
        $region103: #{tpu_custom_call.1} parent=91 // pred_region
          %1158 = vsyncadd %s1150, 0
          %s1159 = sadd.s32 %s38, %s37
          %s1160 = smul.addr %s1159, 8
          %s1161 = scalar_lea.hbm %s18, %s1160
          %s1163 = sshll.u32 %s1153, 4
          %s1164 = int_to_ptr.vmem [resolvable:$true] %s1163
          %s1165 = sshll.u32 %s1161, 4
          %s1166 = int_to_ptr.hbm [resolvable:$true] %s1165
          %1168 = dma.vmem_to_hbm [thread:$0]  %s1164, 128, %s1166, %s1150
        $region104: #{tpu_custom_call.1} parent=91 // pred_fallthru
          _
      $region92: #{tpu_custom_call.1} parent=5 // pred_fallthru
        _
      %p1169 = scmp.le.s32.totalorder 2, %s27
      // Predicated region
      $region105: #{tpu_custom_call.1} parent=5 // pred_check
        %p1170 = pneg %p1169
      $region106: #{tpu_custom_call.1} parent=5 // pred_check_branch
        %1172 = sbr.rel (%p1170) target = $region108
      $region107: #{tpu_custom_call.1} parent=5 // pred_region
        %s1173 = ssub.s32 %s27, 2
        // Predicated region
        $region109: #{tpu_custom_call.1} parent=107 // pred_check
          %p1174 = pneg %p502
        $region110: #{tpu_custom_call.1} parent=107 // pred_check_branch
          %1176 = sbr.rel (%p1174) target = $region112
        $region111: #{tpu_custom_call.1} parent=107 // pred_region
          %s1177 = sand.u32 %s487, 1
          %s1178 = scalar_lea.sflag [#allocation4], %s1177
          %s1179 = sand.u32 %s487, 1
          %s1180 = smul.addr %s1179, 8
          %s1181 = scalar_lea.vmem [#allocation3], %s1180
          %1183 = dma.done %s1178, 128
        $region112: #{tpu_custom_call.1} parent=107 // pred_fallthru
          _
      $region108: #{tpu_custom_call.1} parent=5 // pred_fallthru
        _
    $region6: #{tpu_custom_call.1} parent=1 // loop_footer
      %s31 = sadd.s32 1, %s27
    $region7: #{tpu_custom_call.1} parent=1 // loop_footer_branch
      %26 = sbr.rel target = $region3
    $region8: #{tpu_custom_call.1} parent=1 // loop_exit
      _
    %1184 = vsyncpa [#allocation4], 1
    %s1185 = scalar_lea.sflag [#allocation4], 1
    %1186 = vsyncpa %s1185, 1

</llo_original>
